<compile_context>
chip_gen: v7x
topology: tpu7x:2x2x1
jax: 0.10.0
libtpu: 0.0.40
codegen_flags: <defaults>
</compile_context>

<pallas_src>
import jax
import jax.numpy as jnp
from jax.experimental import pallas as pl
from jax.experimental.pallas import tpu as pltpu


def _round_up(n, m):
    return (n + m - 1) // m * m


def flatten_decoder_kernel(xf_ref, w_fc_ref, b_fc_ref,
                           w_fc1_ref, b_fc1_ref, w_fc2_ref, b_fc2_ref,
                           out_ref):
    """One batch tile per grid step.  All padded rows/lanes are zero-filled in
    the wrapper, so padding contributes exactly nothing to any matmul."""
    xf = xf_ref[...]                                       # (TB, Kfc)  bf16
    TB, Kfc = xf.shape
    Hp, C = w_fc1_ref.shape                                # (256, 3)
    Ep = Kfc // C                                          # 512

    # --- fc: single MXU matmul, bf16 operands, f32 accumulation ------------
    h = jnp.dot(xf, w_fc_ref[...], preferred_element_type=jnp.float32)
    h = h + b_fc_ref[...]                                  # (TB, Hp); pad cols stay 0

    # --- fc1: attention logits over cells (tiny, keep f32) -----------------
    a = jnp.dot(h, w_fc1_ref[...], preferred_element_type=jnp.float32)
    a = a + b_fc1_ref[...]                                 # (TB, C)

    # --- softmax over cells (PyTorch dim=2); C is the true (unpadded) width
    a = a - jnp.max(a, axis=-1, keepdims=True)
    e = jnp.exp(a)
    p = e * pl.reciprocal(jnp.sum(e, axis=-1, keepdims=True), approx=False)

    # --- ctx = p @ resident: C=3 broadcast-FMAs on the VPU (f32) ------------
    # Re-use the already-resident bf16 xf buffer: each cell is a 512-aligned
    # static lane slice (free), cast bf16->f32 before the FMA.
    ctx = jnp.zeros((TB, Ep), jnp.float32)
    for c in range(C):
        xc = xf[:, c * Ep:(c + 1) * Ep].astype(jnp.float32)
        ctx = ctx + p[:, c:c + 1] * xc

    # --- fc2: bf16 MXU matmul (f32 accumulate), lane-dense 128-wide output --
    out = jnp.dot(ctx.astype(jnp.bfloat16), w_fc2_ref[...],
                  preferred_element_type=jnp.float32)
    out = out + b_fc2_ref[...]                             # (TB, Np)
    out_ref[...] = out.astype(out_ref.dtype)


def prepare_params(params):
    """One-time repack of weights into padded / bf16 kernel layouts.
    Hoisted out of the per-call path (the repack is ~1.2 MiB of HBM traffic
    that should not be paid on every forward)."""
    d_in, H = params["w_fc"].shape           # (C*E, 150)
    Hf, C = params["w_fc1"].shape            # (150, C)
    E, N_out = params["w_fc2"].shape         # (E, 96)
    assert Hf == H and d_in == C * E

    Ep = _round_up(E, 128)                   # 512
    Hp = _round_up(H, 128)                   # 256
    Np = _round_up(N_out, 128)               # 128
    Kfc = C * Ep                             # 1536

    # Flatten(1,2) layout [cell0 | cell1 | cell2]; zero-pad each cell E->Ep so
    # the padded activation lanes multiply against zero weight rows.
    w_fc_cells = params["w_fc"].reshape(C, E, H)
    w_fc_pad = jnp.zeros((C, Ep, Hp), jnp.float32).at[:, :E, :H].set(w_fc_cells)
    w_fc_pad = w_fc_pad.reshape(Kfc, Hp).astype(jnp.bfloat16)
    b_fc_pad = jnp.zeros((1, Hp), jnp.float32).at[0, :H].set(params["b_fc"])

    w_fc1_pad = jnp.zeros((Hp, C), jnp.float32).at[:H, :].set(params["w_fc1"])
    b_fc1 = params["b_fc1"].reshape(1, C).astype(jnp.float32)

    w_fc2_pad = (jnp.zeros((Ep, Np), jnp.float32)
                 .at[:E, :N_out].set(params["w_fc2"])
                 .astype(jnp.bfloat16))
    b_fc2_pad = jnp.zeros((1, Np), jnp.float32).at[0, :N_out].set(params["b_fc2"])

    return dict(w_fc=w_fc_pad, b_fc=b_fc_pad,
                w_fc1=w_fc1_pad, b_fc1=b_fc1,
                w_fc2=w_fc2_pad, b_fc2=b_fc2_pad,
                n_out=N_out)


def flatten_decoder_forward(x, prepared, *, batch_tile=None):
    """x: (B, cell_num, embed_dim) float32. Returns (B, 96) float32."""
    B, C, E = x.shape
    Kfc, Hp = prepared["w_fc"].shape
    Ep = Kfc // C
    Np = prepared["w_fc2"].shape[1]
    N_out = prepared["n_out"]
    assert prepared["w_fc1"].shape == (Hp, C) and E <= Ep

    # Batch tile: multiple of 16 (bf16 packs (16,128) per vreg), up to 512 rows
    # (amortizes ~0.35us/step grid overhead; VMEM/step stays at a few MiB).
    # If the batch would give a single grid step, halve the tile so the
    # "parallel" axis has >=2 steps and both v7x TensorCores get work.
    if batch_tile is None:
        TB = min(512, _round_up(B, 16))
        if B > 16 and _round_up(B, TB) // TB < 2:
            TB = _round_up(-(-B // 2), 16)
    else:
        TB = _round_up(batch_tile, 16)
    Bp = _round_up(B, TB)

    # Single fused pad + bf16 cast of the activations (only per-call HBM pass
    # over x outside the kernel itself).
    xf_pad = (jnp.zeros((Bp, C, Ep), jnp.bfloat16)
              .at[:B, :, :E].set(x.astype(jnp.bfloat16))
              .reshape(Bp, Kfc))

    grid = (Bp // TB,)

    out_pad = pl.pallas_call(
        flatten_decoder_kernel,
        out_shape=jax.ShapeDtypeStruct((Bp, Np), jnp.float32),
        grid=grid,
        in_specs=[
            # batch-tiled flattened activations (the ONLY copy of x)
            pl.BlockSpec((TB, Kfc), lambda i: (i, 0)),
            # grid-invariant weights / biases (block index never changes)
            pl.BlockSpec((Kfc, Hp), lambda i: (0, 0)),
            pl.BlockSpec((1, Hp), lambda i: (0, 0)),
            pl.BlockSpec((Hp, C), lambda i: (0, 0)),
            pl.BlockSpec((1, C), lambda i: (0, 0)),
            pl.BlockSpec((Ep, Np), lambda i: (0, 0)),
            pl.BlockSpec((1, Np), lambda i: (0, 0)),
        ],
        out_specs=pl.BlockSpec((TB, Np), lambda i: (i, 0)),
        compiler_params=pltpu.CompilerParams(
            dimension_semantics=("parallel",)),   # batch tiles shard across TCs
    )(xf_pad, prepared["w_fc"], prepared["b_fc"],
      prepared["w_fc1"], prepared["b_fc1"],
      prepared["w_fc2"], prepared["b_fc2"])

    return out_pad[:B, :N_out]


def init_params(key, cell_num=3, embed_dim=500):
    """Deterministic init matching nn.Linear default (uniform ±1/sqrt(fan_in))."""
    d_in = cell_num * embed_dim
    d_fc = int(cell_num * embed_dim / 10)        # must equal 150 (fc1 in_features)
    assert d_fc == 150, "module requires cell_num*embed_dim/10 == 150"

    def linear(k, fan_in, fan_out):
        kw, kb = jax.random.split(k)
        bound = 1.0 / jnp.sqrt(fan_in)
        w = jax.random.uniform(kw, (fan_in, fan_out), jnp.float32, -bound, bound)
        b = jax.random.uniform(kb, (fan_out,), jnp.float32, -bound, bound)
        return w, b

    k0, k1, k2, k3 = jax.random.split(key, 4)
    w_fc, b_fc = linear(k0, d_in, d_fc)          # fc:  (C*E) -> 150
    w_fc1, b_fc1 = linear(k1, 150, cell_num)     # fc1: 150 -> C
    w_fc2, b_fc2 = linear(k2, embed_dim, 96)     # fc2: E -> 96
    # fc3 (96 -> 1) exists in __init__ but is unused in forward; omitted.
    _ = k3
    return dict(w_fc=w_fc, b_fc=b_fc, w_fc1=w_fc1, b_fc1=b_fc1,
                w_fc2=w_fc2, b_fc2=b_fc2)


def flatten_decoder_ref(x, params):
    """Pure-JAX f32 reference mirroring the PyTorch forward."""
    B, C, E = x.shape
    resident = x
    xf = x.reshape(B, 1, C * E)                           # Flatten(1,2) + unsqueeze(1)
    h = xf @ params["w_fc"] + params["b_fc"]              # (B, 1, 150)
    a = h @ params["w_fc1"] + params["b_fc1"]             # (B, 1, C)
    p = jax.nn.softmax(a, axis=2)
    ctx = jnp.einsum("bqc,bce->bqe", p, resident)         # (B, 1, E)
    out = ctx @ params["w_fc2"] + params["b_fc2"]         # (B, 1, 96)
    return jnp.squeeze(out, axis=1)                       # (B, 96)


def flatten_decoder_ref_bf16(x, params):
    """Reference with the same bf16 casts as the kernel (fc operands, resident
    used for ctx, and fc2 operands are bf16; accumulation/softmax in f32)."""
    B, C, E = x.shape
    x_bf = x.astype(jnp.bfloat16)
    xf = x_bf.reshape(B, C * E)
    h = jnp.dot(xf, params["w_fc"].astype(jnp.bfloat16),
                preferred_element_type=jnp.float32) + params["b_fc"]
    a = jnp.dot(h, params["w_fc1"],
                preferred_element_type=jnp.float32) + params["b_fc1"]
    p = jax.nn.softmax(a, axis=-1)
    ctx = jnp.einsum("bc,bce->be", p, x_bf.astype(jnp.float32))
    out = jnp.dot(ctx.astype(jnp.bfloat16),
                  params["w_fc2"].astype(jnp.bfloat16),
                  preferred_element_type=jnp.float32) + params["b_fc2"]
    return out


if __name__ == "__main__":
    B, CELL_NUM, EMBED_DIM = 2, 3, 500

    key = jax.random.PRNGKey(0)
    kx, kp = jax.random.split(key)
    x = jax.random.normal(kx, (B, CELL_NUM, EMBED_DIM), jnp.float32)
    params = init_params(kp, CELL_NUM, EMBED_DIM)
    prepared = prepare_params(params)            # one-time weight repack

    out = jax.block_until_ready(flatten_decoder_forward(x, prepared))
    assert out.shape == (B, 96), out.shape

    # numerics-matched check (same bf16 casts as the kernel): tight tolerance
    ref_bf16 = jax.block_until_ready(flatten_decoder_ref_bf16(x, params))
    err_bf16 = float(jnp.max(jnp.abs(out - ref_bf16)))
    assert jnp.allclose(out, ref_bf16, atol=5e-3, rtol=5e-3), err_bf16

    # full-f32 PyTorch-semantics check: loose tolerance (bf16 fc/ctx/fc2 operands)
    ref_f32 = jax.block_until_ready(flatten_decoder_ref(x, params))
    err_f32 = float(jnp.max(jnp.abs(out - ref_f32)))
    assert jnp.allclose(out, ref_f32, atol=5e-2, rtol=5e-2), err_f32

    print("KERNEL_OK")
</pallas_src>

<mosaic_0001>
module attributes {stable_mosaic.version = 11 : i64} {
  func.func @flatten_decoder_kernel(%arg0: i32, %arg1: memref<16x1536xbf16, #tpu.memory_space<vmem>>, %arg2: memref<1536x256xbf16, #tpu.memory_space<vmem>>, %arg3: memref<1x256xf32, #tpu.memory_space<vmem>>, %arg4: memref<256x3xf32, #tpu.memory_space<vmem>>, %arg5: memref<1x3xf32, #tpu.memory_space<vmem>>, %arg6: memref<512x128xbf16, #tpu.memory_space<vmem>>, %arg7: memref<1x128xf32, #tpu.memory_space<vmem>>, %arg8: memref<16x128xf32, #tpu.memory_space<vmem>>) attributes {dimension_semantics = [#tpu.dimension_semantics<parallel>], iteration_bounds = array<i64: 1>, scalar_prefetch = 0 : i64, scratch_operands = 0 : i64, tpu.core_type = #tpu.core_type<tc>, window_params = [{transform_indices = @transform_0, window_bounds = array<i64: 16, 1536>}, {pipeline_mode = #tpu.pipeline_mode<synchronous>, transform_indices = @transform_1, window_bounds = array<i64: 1536, 256>}, {pipeline_mode = #tpu.pipeline_mode<synchronous>, transform_indices = @transform_2, window_bounds = array<i64: 1, 256>}, {pipeline_mode = #tpu.pipeline_mode<synchronous>, transform_indices = @transform_3, window_bounds = array<i64: 256, 3>}, {pipeline_mode = #tpu.pipeline_mode<synchronous>, transform_indices = @transform_4, window_bounds = array<i64: 1, 3>}, {pipeline_mode = #tpu.pipeline_mode<synchronous>, transform_indices = @transform_5, window_bounds = array<i64: 512, 128>}, {pipeline_mode = #tpu.pipeline_mode<synchronous>, transform_indices = @transform_6, window_bounds = array<i64: 1, 128>}, {transform_indices = @transform_7, window_bounds = array<i64: 16, 128>}]} {
    %c0 = arith.constant 0 : index
    %c0_0 = arith.constant 0 : index
    %0 = vector.load %arg1[%c0, %c0_0] : memref<16x1536xbf16, #tpu.memory_space<vmem>>, vector<16x1536xbf16>
    %c0_1 = arith.constant 0 : index
    %c0_2 = arith.constant 0 : index
    %1 = vector.load %arg2[%c0_1, %c0_2] : memref<1536x256xbf16, #tpu.memory_space<vmem>>, vector<1536x256xbf16>
    %cst = arith.constant dense<0.000000e+00> : vector<16x256xf32>
    %2 = tpu.matmul %0, %1, %cst {dimension_numbers = #tpu.dot_dimension_numbers<[1], [0], [0], [1], [0, 0, 1, 1], [], []>} : vector<16x1536xbf16>, vector<1536x256xbf16>, vector<16x256xf32> -> vector<16x256xf32>
    %c0_3 = arith.constant 0 : index
    %c0_4 = arith.constant 0 : index
    %3 = vector.load %arg3[%c0_3, %c0_4] : memref<1x256xf32, #tpu.memory_space<vmem>>, vector<1x256xf32>
    %4 = vector.broadcast %3 : vector<1x256xf32> to vector<16x256xf32>
    %5 = arith.addf %2, %4 : vector<16x256xf32>
    %c0_5 = arith.constant 0 : index
    %c0_6 = arith.constant 0 : index
    %6 = vector.load %arg4[%c0_5, %c0_6] : memref<256x3xf32, #tpu.memory_space<vmem>>, vector<256x3xf32>
    %cst_7 = arith.constant dense<0.000000e+00> : vector<16x3xf32>
    %7 = tpu.matmul %5, %6, %cst_7 {dimension_numbers = #tpu.dot_dimension_numbers<[1], [0], [0], [1], [0, 0, 1, 1], [], []>} : vector<16x256xf32>, vector<256x3xf32>, vector<16x3xf32> -> vector<16x3xf32>
    %c0_8 = arith.constant 0 : index
    %c0_9 = arith.constant 0 : index
    %8 = vector.load %arg5[%c0_8, %c0_9] : memref<1x3xf32, #tpu.memory_space<vmem>>, vector<1x3xf32>
    %9 = vector.broadcast %8 : vector<1x3xf32> to vector<16x3xf32>
    %10 = arith.addf %7, %9 : vector<16x3xf32>
    %cst_10 = arith.constant dense<0xFF800000> : vector<16xf32>
    %11 = vector.multi_reduction <maximumf>, %10, %cst_10 [1] : vector<16x3xf32> to vector<16xf32>
    %12 = vector.shape_cast %11 : vector<16xf32> to vector<16x1xf32>
    %13 = vector.broadcast %12 : vector<16x1xf32> to vector<16x3xf32>
    %14 = arith.subf %10, %13 : vector<16x3xf32>
    %15 = math.exp %14 : vector<16x3xf32>
    %cst_11 = arith.constant dense<0.000000e+00> : vector<16xf32>
    %16 = vector.multi_reduction <add>, %15, %cst_11 [1] : vector<16x3xf32> to vector<16xf32>
    %17 = vector.shape_cast %16 : vector<16xf32> to vector<16x1xf32>
    %18 = tpu.reciprocal %17 : vector<16x1xf32> -> vector<16x1xf32>
    %19 = vector.broadcast %18 : vector<16x1xf32> to vector<16x3xf32>
    %20 = arith.mulf %15, %19 : vector<16x3xf32>
    %cst_12 = arith.constant 0.000000e+00 : f32
    %21 = vector.broadcast %cst_12 : f32 to vector<16x512xf32>
    %22 = vector.extract_strided_slice %0 {offsets = [0, 0], sizes = [16, 512], strides = [1, 1]} : vector<16x1536xbf16> to vector<16x512xbf16>
    %23 = arith.extf %22 : vector<16x512xbf16> to vector<16x512xf32>
    %24 = vector.extract_strided_slice %20 {offsets = [0, 0], sizes = [16, 1], strides = [1, 1]} : vector<16x3xf32> to vector<16x1xf32>
    %25 = vector.broadcast %24 : vector<16x1xf32> to vector<16x512xf32>
    %26 = arith.mulf %25, %23 : vector<16x512xf32>
    %27 = arith.addf %21, %26 : vector<16x512xf32>
    %28 = vector.extract_strided_slice %0 {offsets = [0, 512], sizes = [16, 512], strides = [1, 1]} : vector<16x1536xbf16> to vector<16x512xbf16>
    %29 = arith.extf %28 : vector<16x512xbf16> to vector<16x512xf32>
    %30 = vector.extract_strided_slice %20 {offsets = [0, 1], sizes = [16, 1], strides = [1, 1]} : vector<16x3xf32> to vector<16x1xf32>
    %31 = vector.broadcast %30 : vector<16x1xf32> to vector<16x512xf32>
    %32 = arith.mulf %31, %29 : vector<16x512xf32>
    %33 = arith.addf %27, %32 : vector<16x512xf32>
    %34 = vector.extract_strided_slice %0 {offsets = [0, 1024], sizes = [16, 512], strides = [1, 1]} : vector<16x1536xbf16> to vector<16x512xbf16>
    %35 = arith.extf %34 : vector<16x512xbf16> to vector<16x512xf32>
    %36 = vector.extract_strided_slice %20 {offsets = [0, 2], sizes = [16, 1], strides = [1, 1]} : vector<16x3xf32> to vector<16x1xf32>
    %37 = vector.broadcast %36 : vector<16x1xf32> to vector<16x512xf32>
    %38 = arith.mulf %37, %35 : vector<16x512xf32>
    %39 = arith.addf %33, %38 : vector<16x512xf32>
    %40 = arith.truncf %39 : vector<16x512xf32> to vector<16x512xbf16>
    %c0_13 = arith.constant 0 : index
    %c0_14 = arith.constant 0 : index
    %41 = vector.load %arg6[%c0_13, %c0_14] : memref<512x128xbf16, #tpu.memory_space<vmem>>, vector<512x128xbf16>
    %cst_15 = arith.constant dense<0.000000e+00> : vector<16x128xf32>
    %42 = tpu.matmul %40, %41, %cst_15 {dimension_numbers = #tpu.dot_dimension_numbers<[1], [0], [0], [1], [0, 0, 1, 1], [], []>} : vector<16x512xbf16>, vector<512x128xbf16>, vector<16x128xf32> -> vector<16x128xf32>
    %c0_16 = arith.constant 0 : index
    %c0_17 = arith.constant 0 : index
    %43 = vector.load %arg7[%c0_16, %c0_17] : memref<1x128xf32, #tpu.memory_space<vmem>>, vector<1x128xf32>
    %44 = vector.broadcast %43 : vector<1x128xf32> to vector<16x128xf32>
    %45 = arith.addf %42, %44 : vector<16x128xf32>
    %c0_18 = arith.constant 0 : index
    %c0_19 = arith.constant 0 : index
    %46 = vector.load %arg8[%c0_18, %c0_19] : memref<16x128xf32, #tpu.memory_space<vmem>>, vector<16x128xf32>
    tpu.vector_store %arg8[%c0_18, %c0_19], %45 {strides = array<i32>} : memref<16x128xf32, #tpu.memory_space<vmem>>, vector<16x128xf32>,
    return
  }
  func.func @transform_0(%arg0: i32) -> (i32, i32) {
    %c0_i32 = arith.constant 0 : i32
    %c0_i32_0 = arith.constant 0 : i32
    return %arg0, %c0_i32 : i32, i32
  }
  func.func @transform_1(%arg0: i32) -> (i32, i32) {
    %c0_i32 = arith.constant 0 : i32
    %c0_i32_0 = arith.constant 0 : i32
    %c0_i32_1 = arith.constant 0 : i32
    return %c0_i32, %c0_i32_0 : i32, i32
  }
  func.func @transform_2(%arg0: i32) -> (i32, i32) {
    %c0_i32 = arith.constant 0 : i32
    %c0_i32_0 = arith.constant 0 : i32
    %c0_i32_1 = arith.constant 0 : i32
    return %c0_i32, %c0_i32_0 : i32, i32
  }
  func.func @transform_3(%arg0: i32) -> (i32, i32) {
    %c0_i32 = arith.constant 0 : i32
    %c0_i32_0 = arith.constant 0 : i32
    %c0_i32_1 = arith.constant 0 : i32
    return %c0_i32, %c0_i32_0 : i32, i32
  }
  func.func @transform_4(%arg0: i32) -> (i32, i32) {
    %c0_i32 = arith.constant 0 : i32
    %c0_i32_0 = arith.constant 0 : i32
    %c0_i32_1 = arith.constant 0 : i32
    return %c0_i32, %c0_i32_0 : i32, i32
  }
  func.func @transform_5(%arg0: i32) -> (i32, i32) {
    %c0_i32 = arith.constant 0 : i32
    %c0_i32_0 = arith.constant 0 : i32
    %c0_i32_1 = arith.constant 0 : i32
    return %c0_i32, %c0_i32_0 : i32, i32
  }
  func.func @transform_6(%arg0: i32) -> (i32, i32) {
    %c0_i32 = arith.constant 0 : i32
    %c0_i32_0 = arith.constant 0 : i32
    %c0_i32_1 = arith.constant 0 : i32
    return %c0_i32, %c0_i32_0 : i32, i32
  }
  func.func @transform_7(%arg0: i32) -> (i32, i32) {
    %c0_i32 = arith.constant 0 : i32
    %c0_i32_0 = arith.constant 0 : i32
    return %arg0, %c0_i32 : i32, i32
  }
}

</mosaic_0001>

<llo_original>
// kernel: tpu_custom_call.1
$region0: #{tpu_custom_call.1}
  #allocation0 [shape = 'u32[]', space=smem, size = 0x4, offset = 0x4, fixed_abs, tag = 'smem constant byte address 0x4 - core index']
  #allocation1 [shape = 'u32[144,128]{1,0:T(1,128)}', space=vmem, size = 0x12000, scoped, tag = 'internal scratch']
  %s0 = inlined_call_operand.hbm [shape: bf16[16,1536], index: 0, kind: input, shape index: {}]
  %s1 = inlined_call_operand.hbm [shape: bf16[1536,256], index: 1, kind: input, shape index: {}]
  %s2 = inlined_call_operand.vmem [shape: f32[1,256], index: 2, kind: input, shape index: {}]
  %s3 = inlined_call_operand.vmem [shape: f32[256,3], index: 3, kind: input, shape index: {}]
  %s4 = inlined_call_operand.vmem [shape: f32[1,3], index: 4, kind: input, shape index: {}]
  %s5 = inlined_call_operand.vmem [shape: bf16[512,128], index: 5, kind: input, shape index: {}]
  %s6 = inlined_call_operand.vmem [shape: f32[1,128], index: 6, kind: input, shape index: {}]
  %s7 = inlined_call_operand.hbm [shape: f32[16,128], index: 7, kind: output, shape index: {}]
  %s8 = sld [smem:[#allocation0]]
  $region46: #{tpu_custom_call.1} parent=0
    _
  %s10 = ssub.s32 1, %s8
  %s11 = scalar_select 0, %s10, %s8
  $region1: #{tpu_custom_call.1} parent=0
    #allocation2 [shape = 'u8[49152]{0}', space=vmem, size = 0xc000, scoped, tag = 'input window, operand 0, single buffered']
    #allocation3 [shape = 's32[1]{0}', space=sflag, size = 0x4, scoped, tag = 'scoped memory for tpu_custom_call.1']
    #allocation4 [shape = 's32[1]{0}', space=sflag, size = 0x4, scoped, tag = 'scoped memory for tpu_custom_call.1']
    #allocation5 [shape = 'u8[786432]{0}', space=vmem, size = 0xc0000, scoped, tag = 'input window, operand 1, single buffered']
    #allocation6 [shape = 's32[1]{0}', space=sflag, size = 0x4, scoped, tag = 'scoped memory for tpu_custom_call.1']
    #allocation7 [shape = 'u8[8192]{0}', space=vmem, size = 0x2000, scoped, tag = 'output window, operand 0, single buffered']
    %12 = vsyncpa [#allocation3], 0
    %13 = vsyncpa [#allocation6], 0
    %14 = vsyncpa [#allocation4], 0
    // Predicated region
    $region2: #{tpu_custom_call.1} parent=1 // pred_check
      _
    $region3: #{tpu_custom_call.1} parent=1 // pred_check_branch
      %16 = sbr.rel (0) target = $region5
    $region4: #{tpu_custom_call.1} parent=1 // pred_region
      %s18 = ssub.s32 1536, 1536
      %19 = vsyncadd [#allocation3], %s18
      %s20 = sshll.u32 [#allocation2], 4
      %s21 = int_to_ptr.vmem [resolvable:$true] %s20
      %26 = dma.hbm_to_vmem [thread:$0]  %s0, 1536, %s21, [#allocation3], 768, 768, 48
    $region5: #{tpu_custom_call.1} parent=1 // pred_fallthru
      _
    // Predicated region
    $region6: #{tpu_custom_call.1} parent=1 // pred_check
      _
    $region7: #{tpu_custom_call.1} parent=1 // pred_check_branch
      %28 = sbr.rel (0) target = $region9
    $region8: #{tpu_custom_call.1} parent=1 // pred_region
      %s30 = ssub.s32 24576, 24576
      %31 = vsyncadd [#allocation6], %s30
      %s32 = sshll.u32 [#allocation5], 4
      %s33 = int_to_ptr.vmem [resolvable:$true] %s32
      %38 = dma.hbm_to_vmem [thread:$0]  %s1, 24576, %s33, [#allocation6], 128, 128, 8
    $region9: #{tpu_custom_call.1} parent=1 // pred_fallthru
      _
    // Predicated region
    $region10: #{tpu_custom_call.1} parent=1 // pred_check
      _
    $region11: #{tpu_custom_call.1} parent=1 // pred_check_branch
      %40 = sbr.rel (0) target = $region13
    $region12: #{tpu_custom_call.1} parent=1 // pred_region
      _
    $region13: #{tpu_custom_call.1} parent=1 // pred_fallthru
      _
    // Predicated region
    $region14: #{tpu_custom_call.1} parent=1 // pred_check
      _
    $region15: #{tpu_custom_call.1} parent=1 // pred_check_branch
      %42 = sbr.rel (0) target = $region17
    $region16: #{tpu_custom_call.1} parent=1 // pred_region
      _
    $region17: #{tpu_custom_call.1} parent=1 // pred_fallthru
      _
    // Predicated region
    $region18: #{tpu_custom_call.1} parent=1 // pred_check
      _
    $region19: #{tpu_custom_call.1} parent=1 // pred_check_branch
      %44 = sbr.rel (0) target = $region21
    $region20: #{tpu_custom_call.1} parent=1 // pred_region
      _
    $region21: #{tpu_custom_call.1} parent=1 // pred_fallthru
      _
    // Predicated region
    $region22: #{tpu_custom_call.1} parent=1 // pred_check
      _
    $region23: #{tpu_custom_call.1} parent=1 // pred_check_branch
      %46 = sbr.rel (0) target = $region25
    $region24: #{tpu_custom_call.1} parent=1 // pred_region
      _
    $region25: #{tpu_custom_call.1} parent=1 // pred_fallthru
      _
    // Predicated region
    $region26: #{tpu_custom_call.1} parent=1 // pred_check
      _
    $region27: #{tpu_custom_call.1} parent=1 // pred_check_branch
      %48 = sbr.rel (0) target = $region29
    $region28: #{tpu_custom_call.1} parent=1 // pred_region
      _
    $region29: #{tpu_custom_call.1} parent=1 // pred_fallthru
      _
    // Predicated region
    $region30: #{tpu_custom_call.1} parent=1 // pred_check
      _
    $region31: #{tpu_custom_call.1} parent=1 // pred_check_branch
      %50 = sbr.rel (0) target = $region33
    $region32: #{tpu_custom_call.1} parent=1 // pred_region
      %51 = dma.done [#allocation3], 1536
    $region33: #{tpu_custom_call.1} parent=1 // pred_fallthru
      _
    // Predicated region
    $region34: #{tpu_custom_call.1} parent=1 // pred_check
      _
    $region35: #{tpu_custom_call.1} parent=1 // pred_check_branch
      %53 = sbr.rel (0) target = $region37
    $region36: #{tpu_custom_call.1} parent=1 // pred_region
      %54 = dma.done [#allocation6], 24576
    $region37: #{tpu_custom_call.1} parent=1 // pred_fallthru
      _
    %v56 = vld [vmem:[#allocation2] sm:$0xff]
    %v57 = vld [vmem:[#allocation2 + $0x8] sm:$0xff]
    %v58 = vld [vmem:[#allocation2 + $0x10] sm:$0xff]
    %v59 = vld [vmem:[#allocation2 + $0x18] sm:$0xff]
    %v60 = vld [vmem:[#allocation2 + $0x20] sm:$0xff]
    %v61 = vld [vmem:[#allocation2 + $0x28] sm:$0xff]
    %v62 = vld [vmem:[#allocation2 + $0x30] sm:$0xff]
    %v63 = vld [vmem:[#allocation2 + $0x38] sm:$0xff]
    %v64 = vld [vmem:[#allocation2 + $0x40] sm:$0xff]
    %v65 = vld [vmem:[#allocation2 + $0x48] sm:$0xff]
    %v66 = vld [vmem:[#allocation2 + $0x50] sm:$0xff]
    %v67 = vld [vmem:[#allocation2 + $0x58] sm:$0xff]
    %v68 = vld [vmem:[#allocation5] sm:$0xff]
    %v69 = vld [vmem:[#allocation5 + $0x8] sm:$0xff]
    %v70 = vld [vmem:[#allocation5 + $0x10] sm:$0xff]
    %v71 = vld [vmem:[#allocation5 + $0x18] sm:$0xff]
    %v72 = vld [vmem:[#allocation5 + $0x20] sm:$0xff]
    %v73 = vld [vmem:[#allocation5 + $0x28] sm:$0xff]
    %v74 = vld [vmem:[#allocation5 + $0x30] sm:$0xff]
    %v75 = vld [vmem:[#allocation5 + $0x38] sm:$0xff]
    %v76 = vld [vmem:[#allocation5 + $0x40] sm:$0xff]
    %v77 = vld [vmem:[#allocation5 + $0x48] sm:$0xff]
    %v78 = vld [vmem:[#allocation5 + $0x50] sm:$0xff]
    %v79 = vld [vmem:[#allocation5 + $0x58] sm:$0xff]
    %v80 = vld [vmem:[#allocation5 + $0x60] sm:$0xff]
    %v81 = vld [vmem:[#allocation5 + $0x68] sm:$0xff]
    %v82 = vld [vmem:[#allocation5 + $0x70] sm:$0xff]
    %v83 = vld [vmem:[#allocation5 + $0x78] sm:$0xff]
    %v84 = vld [vmem:[#allocation5 + $0x80] sm:$0xff]
    %v85 = vld [vmem:[#allocation5 + $0x88] sm:$0xff]
    %v86 = vld [vmem:[#allocation5 + $0x90] sm:$0xff]
    %v87 = vld [vmem:[#allocation5 + $0x98] sm:$0xff]
    %v88 = vld [vmem:[#allocation5 + $0xa0] sm:$0xff]
    %v89 = vld [vmem:[#allocation5 + $0xa8] sm:$0xff]
    %v90 = vld [vmem:[#allocation5 + $0xb0] sm:$0xff]
    %v91 = vld [vmem:[#allocation5 + $0xb8] sm:$0xff]
    %v92 = vld [vmem:[#allocation5 + $0xc0] sm:$0xff]
    %v93 = vld [vmem:[#allocation5 + $0xc8] sm:$0xff]
    %v94 = vld [vmem:[#allocation5 + $0xd0] sm:$0xff]
    %v95 = vld [vmem:[#allocation5 + $0xd8] sm:$0xff]
    %v96 = vld [vmem:[#allocation5 + $0xe0] sm:$0xff]
    %v97 = vld [vmem:[#allocation5 + $0xe8] sm:$0xff]
    %v98 = vld [vmem:[#allocation5 + $0xf0] sm:$0xff]
    %v99 = vld [vmem:[#allocation5 + $0xf8] sm:$0xff]
    %v100 = vld [vmem:[#allocation5 + $0x100] sm:$0xff]
    %v101 = vld [vmem:[#allocation5 + $0x108] sm:$0xff]
    %v102 = vld [vmem:[#allocation5 + $0x110] sm:$0xff]
    %v103 = vld [vmem:[#allocation5 + $0x118] sm:$0xff]
    %v104 = vld [vmem:[#allocation5 + $0x120] sm:$0xff]
    %v105 = vld [vmem:[#allocation5 + $0x128] sm:$0xff]
    %v106 = vld [vmem:[#allocation5 + $0x130] sm:$0xff]
    %v107 = vld [vmem:[#allocation5 + $0x138] sm:$0xff]
    %v108 = vld [vmem:[#allocation5 + $0x140] sm:$0xff]
    %v109 = vld [vmem:[#allocation5 + $0x148] sm:$0xff]
    %v110 = vld [vmem:[#allocation5 + $0x150] sm:$0xff]
    %v111 = vld [vmem:[#allocation5 + $0x158] sm:$0xff]
    %v112 = vld [vmem:[#allocation5 + $0x160] sm:$0xff]
    %v113 = vld [vmem:[#allocation5 + $0x168] sm:$0xff]
    %v114 = vld [vmem:[#allocation5 + $0x170] sm:$0xff]
    %v115 = vld [vmem:[#allocation5 + $0x178] sm:$0xff]
    %v116 = vld [vmem:[#allocation5 + $0x180] sm:$0xff]
    %v117 = vld [vmem:[#allocation5 + $0x188] sm:$0xff]
    %v118 = vld [vmem:[#allocation5 + $0x190] sm:$0xff]
    %v119 = vld [vmem:[#allocation5 + $0x198] sm:$0xff]
    %v120 = vld [vmem:[#allocation5 + $0x1a0] sm:$0xff]
    %v121 = vld [vmem:[#allocation5 + $0x1a8] sm:$0xff]
    %v122 = vld [vmem:[#allocation5 + $0x1b0] sm:$0xff]
    %v123 = vld [vmem:[#allocation5 + $0x1b8] sm:$0xff]
    %v124 = vld [vmem:[#allocation5 + $0x1c0] sm:$0xff]
    %v125 = vld [vmem:[#allocation5 + $0x1c8] sm:$0xff]
    %v126 = vld [vmem:[#allocation5 + $0x1d0] sm:$0xff]
    %v127 = vld [vmem:[#allocation5 + $0x1d8] sm:$0xff]
    %v128 = vld [vmem:[#allocation5 + $0x1e0] sm:$0xff]
    %v129 = vld [vmem:[#allocation5 + $0x1e8] sm:$0xff]
    %v130 = vld [vmem:[#allocation5 + $0x1f0] sm:$0xff]
    %v131 = vld [vmem:[#allocation5 + $0x1f8] sm:$0xff]
    %v132 = vld [vmem:[#allocation5 + $0x200] sm:$0xff]
    %v133 = vld [vmem:[#allocation5 + $0x208] sm:$0xff]
    %v134 = vld [vmem:[#allocation5 + $0x210] sm:$0xff]
    %v135 = vld [vmem:[#allocation5 + $0x218] sm:$0xff]
    %v136 = vld [vmem:[#allocation5 + $0x220] sm:$0xff]
    %v137 = vld [vmem:[#allocation5 + $0x228] sm:$0xff]
    %v138 = vld [vmem:[#allocation5 + $0x230] sm:$0xff]
    %v139 = vld [vmem:[#allocation5 + $0x238] sm:$0xff]
    %v140 = vld [vmem:[#allocation5 + $0x240] sm:$0xff]
    %v141 = vld [vmem:[#allocation5 + $0x248] sm:$0xff]
    %v142 = vld [vmem:[#allocation5 + $0x250] sm:$0xff]
    %v143 = vld [vmem:[#allocation5 + $0x258] sm:$0xff]
    %v144 = vld [vmem:[#allocation5 + $0x260] sm:$0xff]
    %v145 = vld [vmem:[#allocation5 + $0x268] sm:$0xff]
    %v146 = vld [vmem:[#allocation5 + $0x270] sm:$0xff]
    %v147 = vld [vmem:[#allocation5 + $0x278] sm:$0xff]
    %v148 = vld [vmem:[#allocation5 + $0x280] sm:$0xff]
    %v149 = vld [vmem:[#allocation5 + $0x288] sm:$0xff]
    %v150 = vld [vmem:[#allocation5 + $0x290] sm:$0xff]
    %v151 = vld [vmem:[#allocation5 + $0x298] sm:$0xff]
    %v152 = vld [vmem:[#allocation5 + $0x2a0] sm:$0xff]
    %v153 = vld [vmem:[#allocation5 + $0x2a8] sm:$0xff]
    %v154 = vld [vmem:[#allocation5 + $0x2b0] sm:$0xff]
    %v155 = vld [vmem:[#allocation5 + $0x2b8] sm:$0xff]
    %v156 = vld [vmem:[#allocation5 + $0x2c0] sm:$0xff]
    %v157 = vld [vmem:[#allocation5 + $0x2c8] sm:$0xff]
    %v158 = vld [vmem:[#allocation5 + $0x2d0] sm:$0xff]
    %v159 = vld [vmem:[#allocation5 + $0x2d8] sm:$0xff]
    %v160 = vld [vmem:[#allocation5 + $0x2e0] sm:$0xff]
    %v161 = vld [vmem:[#allocation5 + $0x2e8] sm:$0xff]
    %v162 = vld [vmem:[#allocation5 + $0x2f0] sm:$0xff]
    %v163 = vld [vmem:[#allocation5 + $0x2f8] sm:$0xff]
    %v164 = vld [vmem:[#allocation5 + $0x300] sm:$0xff]
    %v165 = vld [vmem:[#allocation5 + $0x308] sm:$0xff]
    %v166 = vld [vmem:[#allocation5 + $0x310] sm:$0xff]
    %v167 = vld [vmem:[#allocation5 + $0x318] sm:$0xff]
    %v168 = vld [vmem:[#allocation5 + $0x320] sm:$0xff]
    %v169 = vld [vmem:[#allocation5 + $0x328] sm:$0xff]
    %v170 = vld [vmem:[#allocation5 + $0x330] sm:$0xff]
    %v171 = vld [vmem:[#allocation5 + $0x338] sm:$0xff]
    %v172 = vld [vmem:[#allocation5 + $0x340] sm:$0xff]
    %v173 = vld [vmem:[#allocation5 + $0x348] sm:$0xff]
    %v174 = vld [vmem:[#allocation5 + $0x350] sm:$0xff]
    %v175 = vld [vmem:[#allocation5 + $0x358] sm:$0xff]
    %v176 = vld [vmem:[#allocation5 + $0x360] sm:$0xff]
    %v177 = vld [vmem:[#allocation5 + $0x368] sm:$0xff]
    %v178 = vld [vmem:[#allocation5 + $0x370] sm:$0xff]
    %v179 = vld [vmem:[#allocation5 + $0x378] sm:$0xff]
    %v180 = vld [vmem:[#allocation5 + $0x380] sm:$0xff]
    %v181 = vld [vmem:[#allocation5 + $0x388] sm:$0xff]
    %v182 = vld [vmem:[#allocation5 + $0x390] sm:$0xff]
    %v183 = vld [vmem:[#allocation5 + $0x398] sm:$0xff]
    %v184 = vld [vmem:[#allocation5 + $0x3a0] sm:$0xff]
    %v185 = vld [vmem:[#allocation5 + $0x3a8] sm:$0xff]
    %v186 = vld [vmem:[#allocation5 + $0x3b0] sm:$0xff]
    %v187 = vld [vmem:[#allocation5 + $0x3b8] sm:$0xff]
    %v188 = vld [vmem:[#allocation5 + $0x3c0] sm:$0xff]
    %v189 = vld [vmem:[#allocation5 + $0x3c8] sm:$0xff]
    %v190 = vld [vmem:[#allocation5 + $0x3d0] sm:$0xff]
    %v191 = vld [vmem:[#allocation5 + $0x3d8] sm:$0xff]
    %v192 = vld [vmem:[#allocation5 + $0x3e0] sm:$0xff]
    %v193 = vld [vmem:[#allocation5 + $0x3e8] sm:$0xff]
    %v194 = vld [vmem:[#allocation5 + $0x3f0] sm:$0xff]
    %v195 = vld [vmem:[#allocation5 + $0x3f8] sm:$0xff]
    %v196 = vld [vmem:[#allocation5 + $0x400] sm:$0xff]
    %v197 = vld [vmem:[#allocation5 + $0x408] sm:$0xff]
    %v198 = vld [vmem:[#allocation5 + $0x410] sm:$0xff]
    %v199 = vld [vmem:[#allocation5 + $0x418] sm:$0xff]
    %v200 = vld [vmem:[#allocation5 + $0x420] sm:$0xff]
    %v201 = vld [vmem:[#allocation5 + $0x428] sm:$0xff]
    %v202 = vld [vmem:[#allocation5 + $0x430] sm:$0xff]
    %v203 = vld [vmem:[#allocation5 + $0x438] sm:$0xff]
    %v204 = vld [vmem:[#allocation5 + $0x440] sm:$0xff]
    %v205 = vld [vmem:[#allocation5 + $0x448] sm:$0xff]
    %v206 = vld [vmem:[#allocation5 + $0x450] sm:$0xff]
    %v207 = vld [vmem:[#allocation5 + $0x458] sm:$0xff]
    %v208 = vld [vmem:[#allocation5 + $0x460] sm:$0xff]
    %v209 = vld [vmem:[#allocation5 + $0x468] sm:$0xff]
    %v210 = vld [vmem:[#allocation5 + $0x470] sm:$0xff]
    %v211 = vld [vmem:[#allocation5 + $0x478] sm:$0xff]
    %v212 = vld [vmem:[#allocation5 + $0x480] sm:$0xff]
    %v213 = vld [vmem:[#allocation5 + $0x488] sm:$0xff]
    %v214 = vld [vmem:[#allocation5 + $0x490] sm:$0xff]
    %v215 = vld [vmem:[#allocation5 + $0x498] sm:$0xff]
    %v216 = vld [vmem:[#allocation5 + $0x4a0] sm:$0xff]
    %v217 = vld [vmem:[#allocation5 + $0x4a8] sm:$0xff]
    %v218 = vld [vmem:[#allocation5 + $0x4b0] sm:$0xff]
    %v219 = vld [vmem:[#allocation5 + $0x4b8] sm:$0xff]
    %v220 = vld [vmem:[#allocation5 + $0x4c0] sm:$0xff]
    %v221 = vld [vmem:[#allocation5 + $0x4c8] sm:$0xff]
    %v222 = vld [vmem:[#allocation5 + $0x4d0] sm:$0xff]
    %v223 = vld [vmem:[#allocation5 + $0x4d8] sm:$0xff]
    %v224 = vld [vmem:[#allocation5 + $0x4e0] sm:$0xff]
    %v225 = vld [vmem:[#allocation5 + $0x4e8] sm:$0xff]
    %v226 = vld [vmem:[#allocation5 + $0x4f0] sm:$0xff]
    %v227 = vld [vmem:[#allocation5 + $0x4f8] sm:$0xff]
    %v228 = vld [vmem:[#allocation5 + $0x500] sm:$0xff]
    %v229 = vld [vmem:[#allocation5 + $0x508] sm:$0xff]
    %v230 = vld [vmem:[#allocation5 + $0x510] sm:$0xff]
    %v231 = vld [vmem:[#allocation5 + $0x518] sm:$0xff]
    %v232 = vld [vmem:[#allocation5 + $0x520] sm:$0xff]
    %v233 = vld [vmem:[#allocation5 + $0x528] sm:$0xff]
    %v234 = vld [vmem:[#allocation5 + $0x530] sm:$0xff]
    %v235 = vld [vmem:[#allocation5 + $0x538] sm:$0xff]
    %v236 = vld [vmem:[#allocation5 + $0x540] sm:$0xff]
    %v237 = vld [vmem:[#allocation5 + $0x548] sm:$0xff]
    %v238 = vld [vmem:[#allocation5 + $0x550] sm:$0xff]
    %v239 = vld [vmem:[#allocation5 + $0x558] sm:$0xff]
    %v240 = vld [vmem:[#allocation5 + $0x560] sm:$0xff]
    %v241 = vld [vmem:[#allocation5 + $0x568] sm:$0xff]
    %v242 = vld [vmem:[#allocation5 + $0x570] sm:$0xff]
    %v243 = vld [vmem:[#allocation5 + $0x578] sm:$0xff]
    %v244 = vld [vmem:[#allocation5 + $0x580] sm:$0xff]
    %v245 = vld [vmem:[#allocation5 + $0x588] sm:$0xff]
    %v246 = vld [vmem:[#allocation5 + $0x590] sm:$0xff]
    %v247 = vld [vmem:[#allocation5 + $0x598] sm:$0xff]
    %v248 = vld [vmem:[#allocation5 + $0x5a0] sm:$0xff]
    %v249 = vld [vmem:[#allocation5 + $0x5a8] sm:$0xff]
    %v250 = vld [vmem:[#allocation5 + $0x5b0] sm:$0xff]
    %v251 = vld [vmem:[#allocation5 + $0x5b8] sm:$0xff]
    %v252 = vld [vmem:[#allocation5 + $0x5c0] sm:$0xff]
    %v253 = vld [vmem:[#allocation5 + $0x5c8] sm:$0xff]
    %v254 = vld [vmem:[#allocation5 + $0x5d0] sm:$0xff]
    %v255 = vld [vmem:[#allocation5 + $0x5d8] sm:$0xff]
    %v256 = vld [vmem:[#allocation5 + $0x5e0] sm:$0xff]
    %v257 = vld [vmem:[#allocation5 + $0x5e8] sm:$0xff]
    %v258 = vld [vmem:[#allocation5 + $0x5f0] sm:$0xff]
    %v259 = vld [vmem:[#allocation5 + $0x5f8] sm:$0xff]
    %v260 = vld [vmem:[%s2] sm:$0x3]
    %v262 = vlaneseq
    %v263 = vshrl.u32 %v262, 7
    %v264 = vsub.s32 0, %v263
    %v265 = vrot.slane %v260, %v264
    %v266 = vlaneseq
    %v267 = vshrl.u32 %v266, 7
    %v268 = vsub.s32 1, %v267
    %v269 = vrot.slane %v260, %v268
    %v284 = vunpack.c.l.b16 %v56
    %v285 = vunpack.c.h.b16 %v56
    %v286 = vunpack.c.l.b16 %v57
    %v287 = vunpack.c.h.b16 %v57
    %v288 = vunpack.c.l.b16 %v58
    %v289 = vunpack.c.h.b16 %v58
    %v290 = vunpack.c.l.b16 %v59
    %v291 = vunpack.c.h.b16 %v59
    %v292 = vunpack.c.l.b16 %v60
    %v293 = vunpack.c.h.b16 %v60
    %v294 = vunpack.c.l.b16 %v61
    %v295 = vunpack.c.h.b16 %v61
    %v296 = vunpack.c.l.b16 %v62
    %v297 = vunpack.c.h.b16 %v62
    %v298 = vunpack.c.l.b16 %v63
    %v299 = vunpack.c.h.b16 %v63
    %v300 = vunpack.c.l.b16 %v64
    %v301 = vunpack.c.h.b16 %v64
    %v302 = vunpack.c.l.b16 %v65
    %v303 = vunpack.c.h.b16 %v65
    %v304 = vunpack.c.l.b16 %v66
    %v305 = vunpack.c.h.b16 %v66
    %v306 = vunpack.c.l.b16 %v67
    %v307 = vunpack.c.h.b16 %v67
    %v308 = vpack.c.b16 %v296, %v284
    %v309 = vpack.c.b16 %v297, %v285
    %v310 = vpack.c.b16 %v298, %v286
    %v311 = vpack.c.b16 %v299, %v287
    %v312 = vpack.c.b16 %v300, %v288
    %v313 = vpack.c.b16 %v301, %v289
    %v314 = vpack.c.b16 %v302, %v290
    %v315 = vpack.c.b16 %v303, %v291
    %v316 = vpack.c.b16 %v304, %v292
    %v317 = vpack.c.b16 %v305, %v293
    %v318 = vpack.c.b16 %v306, %v294
    %v319 = vpack.c.b16 %v307, %v295
    %v524 = vunpack.c.l.b16 %v68
    %v525 = vunpack.c.h.b16 %v68
    %v526 = vunpack.c.l.b16 %v69
    %v527 = vunpack.c.h.b16 %v69
    %v528 = vunpack.c.l.b16 %v70
    %v529 = vunpack.c.h.b16 %v70
    %v530 = vunpack.c.l.b16 %v71
    %v531 = vunpack.c.h.b16 %v71
    %v532 = vunpack.c.l.b16 %v72
    %v533 = vunpack.c.h.b16 %v72
    %v534 = vunpack.c.l.b16 %v73
    %v535 = vunpack.c.h.b16 %v73
    %v536 = vunpack.c.l.b16 %v74
    %v537 = vunpack.c.h.b16 %v74
    %v538 = vunpack.c.l.b16 %v75
    %v539 = vunpack.c.h.b16 %v75
    %v540 = vunpack.c.l.b16 %v76
    %v541 = vunpack.c.h.b16 %v76
    %v542 = vunpack.c.l.b16 %v77
    %v543 = vunpack.c.h.b16 %v77
    %v544 = vunpack.c.l.b16 %v78
    %v545 = vunpack.c.h.b16 %v78
    %v546 = vunpack.c.l.b16 %v79
    %v547 = vunpack.c.h.b16 %v79
    %v548 = vunpack.c.l.b16 %v80
    %v549 = vunpack.c.h.b16 %v80
    %v550 = vunpack.c.l.b16 %v81
    %v551 = vunpack.c.h.b16 %v81
    %v552 = vunpack.c.l.b16 %v82
    %v553 = vunpack.c.h.b16 %v82
    %v554 = vunpack.c.l.b16 %v83
    %v555 = vunpack.c.h.b16 %v83
    %v556 = vunpack.c.l.b16 %v84
    %v557 = vunpack.c.h.b16 %v84
    %v558 = vunpack.c.l.b16 %v85
    %v559 = vunpack.c.h.b16 %v85
    %v560 = vunpack.c.l.b16 %v86
    %v561 = vunpack.c.h.b16 %v86
    %v562 = vunpack.c.l.b16 %v87
    %v563 = vunpack.c.h.b16 %v87
    %v564 = vunpack.c.l.b16 %v88
    %v565 = vunpack.c.h.b16 %v88
    %v566 = vunpack.c.l.b16 %v89
    %v567 = vunpack.c.h.b16 %v89
    %v568 = vunpack.c.l.b16 %v90
    %v569 = vunpack.c.h.b16 %v90
    %v570 = vunpack.c.l.b16 %v91
    %v571 = vunpack.c.h.b16 %v91
    %v572 = vunpack.c.l.b16 %v92
    %v573 = vunpack.c.h.b16 %v92
    %v574 = vunpack.c.l.b16 %v93
    %v575 = vunpack.c.h.b16 %v93
    %v576 = vunpack.c.l.b16 %v94
    %v577 = vunpack.c.h.b16 %v94
    %v578 = vunpack.c.l.b16 %v95
    %v579 = vunpack.c.h.b16 %v95
    %v580 = vunpack.c.l.b16 %v96
    %v581 = vunpack.c.h.b16 %v96
    %v582 = vunpack.c.l.b16 %v97
    %v583 = vunpack.c.h.b16 %v97
    %v584 = vunpack.c.l.b16 %v98
    %v585 = vunpack.c.h.b16 %v98
    %v586 = vunpack.c.l.b16 %v99
    %v587 = vunpack.c.h.b16 %v99
    %v588 = vunpack.c.l.b16 %v100
    %v589 = vunpack.c.h.b16 %v100
    %v590 = vunpack.c.l.b16 %v101
    %v591 = vunpack.c.h.b16 %v101
    %v592 = vunpack.c.l.b16 %v102
    %v593 = vunpack.c.h.b16 %v102
    %v594 = vunpack.c.l.b16 %v103
    %v595 = vunpack.c.h.b16 %v103
    %v596 = vunpack.c.l.b16 %v104
    %v597 = vunpack.c.h.b16 %v104
    %v598 = vunpack.c.l.b16 %v105
    %v599 = vunpack.c.h.b16 %v105
    %v600 = vunpack.c.l.b16 %v106
    %v601 = vunpack.c.h.b16 %v106
    %v602 = vunpack.c.l.b16 %v107
    %v603 = vunpack.c.h.b16 %v107
    %v604 = vunpack.c.l.b16 %v108
    %v605 = vunpack.c.h.b16 %v108
    %v606 = vunpack.c.l.b16 %v109
    %v607 = vunpack.c.h.b16 %v109
    %v608 = vunpack.c.l.b16 %v110
    %v609 = vunpack.c.h.b16 %v110
    %v610 = vunpack.c.l.b16 %v111
    %v611 = vunpack.c.h.b16 %v111
    %v612 = vunpack.c.l.b16 %v112
    %v613 = vunpack.c.h.b16 %v112
    %v614 = vunpack.c.l.b16 %v113
    %v615 = vunpack.c.h.b16 %v113
    %v616 = vunpack.c.l.b16 %v114
    %v617 = vunpack.c.h.b16 %v114
    %v618 = vunpack.c.l.b16 %v115
    %v619 = vunpack.c.h.b16 %v115
    %v620 = vunpack.c.l.b16 %v116
    %v621 = vunpack.c.h.b16 %v116
    %v622 = vunpack.c.l.b16 %v117
    %v623 = vunpack.c.h.b16 %v117
    %v624 = vunpack.c.l.b16 %v118
    %v625 = vunpack.c.h.b16 %v118
    %v626 = vunpack.c.l.b16 %v119
    %v627 = vunpack.c.h.b16 %v119
    %v628 = vunpack.c.l.b16 %v120
    %v629 = vunpack.c.h.b16 %v120
    %v630 = vunpack.c.l.b16 %v121
    %v631 = vunpack.c.h.b16 %v121
    %v632 = vunpack.c.l.b16 %v122
    %v633 = vunpack.c.h.b16 %v122
    %v634 = vunpack.c.l.b16 %v123
    %v635 = vunpack.c.h.b16 %v123
    %v636 = vunpack.c.l.b16 %v124
    %v637 = vunpack.c.h.b16 %v124
    %v638 = vunpack.c.l.b16 %v125
    %v639 = vunpack.c.h.b16 %v125
    %v640 = vunpack.c.l.b16 %v126
    %v641 = vunpack.c.h.b16 %v126
    %v642 = vunpack.c.l.b16 %v127
    %v643 = vunpack.c.h.b16 %v127
    %v644 = vunpack.c.l.b16 %v128
    %v645 = vunpack.c.h.b16 %v128
    %v646 = vunpack.c.l.b16 %v129
    %v647 = vunpack.c.h.b16 %v129
    %v648 = vunpack.c.l.b16 %v130
    %v649 = vunpack.c.h.b16 %v130
    %v650 = vunpack.c.l.b16 %v131
    %v651 = vunpack.c.h.b16 %v131
    %v652 = vunpack.c.l.b16 %v132
    %v653 = vunpack.c.h.b16 %v132
    %v654 = vunpack.c.l.b16 %v133
    %v655 = vunpack.c.h.b16 %v133
    %v656 = vunpack.c.l.b16 %v134
    %v657 = vunpack.c.h.b16 %v134
    %v658 = vunpack.c.l.b16 %v135
    %v659 = vunpack.c.h.b16 %v135
    %v660 = vunpack.c.l.b16 %v136
    %v661 = vunpack.c.h.b16 %v136
    %v662 = vunpack.c.l.b16 %v137
    %v663 = vunpack.c.h.b16 %v137
    %v664 = vunpack.c.l.b16 %v138
    %v665 = vunpack.c.h.b16 %v138
    %v666 = vunpack.c.l.b16 %v139
    %v667 = vunpack.c.h.b16 %v139
    %v668 = vunpack.c.l.b16 %v140
    %v669 = vunpack.c.h.b16 %v140
    %v670 = vunpack.c.l.b16 %v141
    %v671 = vunpack.c.h.b16 %v141
    %v672 = vunpack.c.l.b16 %v142
    %v673 = vunpack.c.h.b16 %v142
    %v674 = vunpack.c.l.b16 %v143
    %v675 = vunpack.c.h.b16 %v143
    %v676 = vunpack.c.l.b16 %v144
    %v677 = vunpack.c.h.b16 %v144
    %v678 = vunpack.c.l.b16 %v145
    %v679 = vunpack.c.h.b16 %v145
    %v680 = vunpack.c.l.b16 %v146
    %v681 = vunpack.c.h.b16 %v146
    %v682 = vunpack.c.l.b16 %v147
    %v683 = vunpack.c.h.b16 %v147
    %v684 = vunpack.c.l.b16 %v148
    %v685 = vunpack.c.h.b16 %v148
    %v686 = vunpack.c.l.b16 %v149
    %v687 = vunpack.c.h.b16 %v149
    %v688 = vunpack.c.l.b16 %v150
    %v689 = vunpack.c.h.b16 %v150
    %v690 = vunpack.c.l.b16 %v151
    %v691 = vunpack.c.h.b16 %v151
    %v692 = vunpack.c.l.b16 %v152
    %v693 = vunpack.c.h.b16 %v152
    %v694 = vunpack.c.l.b16 %v153
    %v695 = vunpack.c.h.b16 %v153
    %v696 = vunpack.c.l.b16 %v154
    %v697 = vunpack.c.h.b16 %v154
    %v698 = vunpack.c.l.b16 %v155
    %v699 = vunpack.c.h.b16 %v155
    %v700 = vunpack.c.l.b16 %v156
    %v701 = vunpack.c.h.b16 %v156
    %v702 = vunpack.c.l.b16 %v157
    %v703 = vunpack.c.h.b16 %v157
    %v704 = vunpack.c.l.b16 %v158
    %v705 = vunpack.c.h.b16 %v158
    %v706 = vunpack.c.l.b16 %v159
    %v707 = vunpack.c.h.b16 %v159
    %v708 = vunpack.c.l.b16 %v160
    %v709 = vunpack.c.h.b16 %v160
    %v710 = vunpack.c.l.b16 %v161
    %v711 = vunpack.c.h.b16 %v161
    %v712 = vunpack.c.l.b16 %v162
    %v713 = vunpack.c.h.b16 %v162
    %v714 = vunpack.c.l.b16 %v163
    %v715 = vunpack.c.h.b16 %v163
    %v716 = vunpack.c.l.b16 %v164
    %v717 = vunpack.c.h.b16 %v164
    %v718 = vunpack.c.l.b16 %v165
    %v719 = vunpack.c.h.b16 %v165
    %v720 = vunpack.c.l.b16 %v166
    %v721 = vunpack.c.h.b16 %v166
    %v722 = vunpack.c.l.b16 %v167
    %v723 = vunpack.c.h.b16 %v167
    %v724 = vunpack.c.l.b16 %v168
    %v725 = vunpack.c.h.b16 %v168
    %v726 = vunpack.c.l.b16 %v169
    %v727 = vunpack.c.h.b16 %v169
    %v728 = vunpack.c.l.b16 %v170
    %v729 = vunpack.c.h.b16 %v170
    %v730 = vunpack.c.l.b16 %v171
    %v731 = vunpack.c.h.b16 %v171
    %v732 = vunpack.c.l.b16 %v172
    %v733 = vunpack.c.h.b16 %v172
    %v734 = vunpack.c.l.b16 %v173
    %v735 = vunpack.c.h.b16 %v173
    %v736 = vunpack.c.l.b16 %v174
    %v737 = vunpack.c.h.b16 %v174
    %v738 = vunpack.c.l.b16 %v175
    %v739 = vunpack.c.h.b16 %v175
    %v740 = vunpack.c.l.b16 %v176
    %v741 = vunpack.c.h.b16 %v176
    %v742 = vunpack.c.l.b16 %v177
    %v743 = vunpack.c.h.b16 %v177
    %v744 = vunpack.c.l.b16 %v178
    %v745 = vunpack.c.h.b16 %v178
    %v746 = vunpack.c.l.b16 %v179
    %v747 = vunpack.c.h.b16 %v179
    %v748 = vunpack.c.l.b16 %v180
    %v749 = vunpack.c.h.b16 %v180
    %v750 = vunpack.c.l.b16 %v181
    %v751 = vunpack.c.h.b16 %v181
    %v752 = vunpack.c.l.b16 %v182
    %v753 = vunpack.c.h.b16 %v182
    %v754 = vunpack.c.l.b16 %v183
    %v755 = vunpack.c.h.b16 %v183
    %v756 = vunpack.c.l.b16 %v184
    %v757 = vunpack.c.h.b16 %v184
    %v758 = vunpack.c.l.b16 %v185
    %v759 = vunpack.c.h.b16 %v185
    %v760 = vunpack.c.l.b16 %v186
    %v761 = vunpack.c.h.b16 %v186
    %v762 = vunpack.c.l.b16 %v187
    %v763 = vunpack.c.h.b16 %v187
    %v764 = vunpack.c.l.b16 %v188
    %v765 = vunpack.c.h.b16 %v188
    %v766 = vunpack.c.l.b16 %v189
    %v767 = vunpack.c.h.b16 %v189
    %v768 = vunpack.c.l.b16 %v190
    %v769 = vunpack.c.h.b16 %v190
    %v770 = vunpack.c.l.b16 %v191
    %v771 = vunpack.c.h.b16 %v191
    %v772 = vunpack.c.l.b16 %v192
    %v773 = vunpack.c.h.b16 %v192
    %v774 = vunpack.c.l.b16 %v193
    %v775 = vunpack.c.h.b16 %v193
    %v776 = vunpack.c.l.b16 %v194
    %v777 = vunpack.c.h.b16 %v194
    %v778 = vunpack.c.l.b16 %v195
    %v779 = vunpack.c.h.b16 %v195
    %v780 = vunpack.c.l.b16 %v196
    %v781 = vunpack.c.h.b16 %v196
    %v782 = vunpack.c.l.b16 %v197
    %v783 = vunpack.c.h.b16 %v197
    %v784 = vunpack.c.l.b16 %v198
    %v785 = vunpack.c.h.b16 %v198
    %v786 = vunpack.c.l.b16 %v199
    %v787 = vunpack.c.h.b16 %v199
    %v788 = vunpack.c.l.b16 %v200
    %v789 = vunpack.c.h.b16 %v200
    %v790 = vunpack.c.l.b16 %v201
    %v791 = vunpack.c.h.b16 %v201
    %v792 = vunpack.c.l.b16 %v202
    %v793 = vunpack.c.h.b16 %v202
    %v794 = vunpack.c.l.b16 %v203
    %v795 = vunpack.c.h.b16 %v203
    %v796 = vunpack.c.l.b16 %v204
    %v797 = vunpack.c.h.b16 %v204
    %v798 = vunpack.c.l.b16 %v205
    %v799 = vunpack.c.h.b16 %v205
    %v800 = vunpack.c.l.b16 %v206
    %v801 = vunpack.c.h.b16 %v206
    %v802 = vunpack.c.l.b16 %v207
    %v803 = vunpack.c.h.b16 %v207
    %v804 = vunpack.c.l.b16 %v208
    %v805 = vunpack.c.h.b16 %v208
    %v806 = vunpack.c.l.b16 %v209
    %v807 = vunpack.c.h.b16 %v209
    %v808 = vunpack.c.l.b16 %v210
    %v809 = vunpack.c.h.b16 %v210
    %v810 = vunpack.c.l.b16 %v211
    %v811 = vunpack.c.h.b16 %v211
    %v812 = vunpack.c.l.b16 %v212
    %v813 = vunpack.c.h.b16 %v212
    %v814 = vunpack.c.l.b16 %v213
    %v815 = vunpack.c.h.b16 %v213
    %v816 = vunpack.c.l.b16 %v214
    %v817 = vunpack.c.h.b16 %v214
    %v818 = vunpack.c.l.b16 %v215
    %v819 = vunpack.c.h.b16 %v215
    %v820 = vunpack.c.l.b16 %v216
    %v821 = vunpack.c.h.b16 %v216
    %v822 = vunpack.c.l.b16 %v217
    %v823 = vunpack.c.h.b16 %v217
    %v824 = vunpack.c.l.b16 %v218
    %v825 = vunpack.c.h.b16 %v218
    %v826 = vunpack.c.l.b16 %v219
    %v827 = vunpack.c.h.b16 %v219
    %v828 = vunpack.c.l.b16 %v220
    %v829 = vunpack.c.h.b16 %v220
    %v830 = vunpack.c.l.b16 %v221
    %v831 = vunpack.c.h.b16 %v221
    %v832 = vunpack.c.l.b16 %v222
    %v833 = vunpack.c.h.b16 %v222
    %v834 = vunpack.c.l.b16 %v223
    %v835 = vunpack.c.h.b16 %v223
    %v836 = vunpack.c.l.b16 %v224
    %v837 = vunpack.c.h.b16 %v224
    %v838 = vunpack.c.l.b16 %v225
    %v839 = vunpack.c.h.b16 %v225
    %v840 = vunpack.c.l.b16 %v226
    %v841 = vunpack.c.h.b16 %v226
    %v842 = vunpack.c.l.b16 %v227
    %v843 = vunpack.c.h.b16 %v227
    %v844 = vunpack.c.l.b16 %v228
    %v845 = vunpack.c.h.b16 %v228
    %v846 = vunpack.c.l.b16 %v229
    %v847 = vunpack.c.h.b16 %v229
    %v848 = vunpack.c.l.b16 %v230
    %v849 = vunpack.c.h.b16 %v230
    %v850 = vunpack.c.l.b16 %v231
    %v851 = vunpack.c.h.b16 %v231
    %v852 = vunpack.c.l.b16 %v232
    %v853 = vunpack.c.h.b16 %v232
    %v854 = vunpack.c.l.b16 %v233
    %v855 = vunpack.c.h.b16 %v233
    %v856 = vunpack.c.l.b16 %v234
    %v857 = vunpack.c.h.b16 %v234
    %v858 = vunpack.c.l.b16 %v235
    %v859 = vunpack.c.h.b16 %v235
    %v860 = vunpack.c.l.b16 %v236
    %v861 = vunpack.c.h.b16 %v236
    %v862 = vunpack.c.l.b16 %v237
    %v863 = vunpack.c.h.b16 %v237
    %v864 = vunpack.c.l.b16 %v238
    %v865 = vunpack.c.h.b16 %v238
    %v866 = vunpack.c.l.b16 %v239
    %v867 = vunpack.c.h.b16 %v239
    %v868 = vunpack.c.l.b16 %v240
    %v869 = vunpack.c.h.b16 %v240
    %v870 = vunpack.c.l.b16 %v241
    %v871 = vunpack.c.h.b16 %v241
    %v872 = vunpack.c.l.b16 %v242
    %v873 = vunpack.c.h.b16 %v242
    %v874 = vunpack.c.l.b16 %v243
    %v875 = vunpack.c.h.b16 %v243
    %v876 = vunpack.c.l.b16 %v244
    %v877 = vunpack.c.h.b16 %v244
    %v878 = vunpack.c.l.b16 %v245
    %v879 = vunpack.c.h.b16 %v245
    %v880 = vunpack.c.l.b16 %v246
    %v881 = vunpack.c.h.b16 %v246
    %v882 = vunpack.c.l.b16 %v247
    %v883 = vunpack.c.h.b16 %v247
    %v884 = vunpack.c.l.b16 %v248
    %v885 = vunpack.c.h.b16 %v248
    %v886 = vunpack.c.l.b16 %v249
    %v887 = vunpack.c.h.b16 %v249
    %v888 = vunpack.c.l.b16 %v250
    %v889 = vunpack.c.h.b16 %v250
    %v890 = vunpack.c.l.b16 %v251
    %v891 = vunpack.c.h.b16 %v251
    %v892 = vunpack.c.l.b16 %v252
    %v893 = vunpack.c.h.b16 %v252
    %v894 = vunpack.c.l.b16 %v253
    %v895 = vunpack.c.h.b16 %v253
    %v896 = vunpack.c.l.b16 %v254
    %v897 = vunpack.c.h.b16 %v254
    %v898 = vunpack.c.l.b16 %v255
    %v899 = vunpack.c.h.b16 %v255
    %v900 = vunpack.c.l.b16 %v256
    %v901 = vunpack.c.h.b16 %v256
    %v902 = vunpack.c.l.b16 %v257
    %v903 = vunpack.c.h.b16 %v257
    %v904 = vunpack.c.l.b16 %v258
    %v905 = vunpack.c.h.b16 %v258
    %v906 = vunpack.c.l.b16 %v259
    %v907 = vunpack.c.h.b16 %v259
    %v908 = vpack.c.b16 %v526, %v524
    %v909 = vpack.c.b16 %v527, %v525
    %v910 = vpack.c.b16 %v530, %v528
    %v911 = vpack.c.b16 %v531, %v529
    %v912 = vpack.c.b16 %v534, %v532
    %v913 = vpack.c.b16 %v535, %v533
    %v914 = vpack.c.b16 %v538, %v536
    %v915 = vpack.c.b16 %v539, %v537
    %v916 = vpack.c.b16 %v542, %v540
    %v917 = vpack.c.b16 %v543, %v541
    %v918 = vpack.c.b16 %v546, %v544
    %v919 = vpack.c.b16 %v547, %v545
    %v920 = vpack.c.b16 %v550, %v548
    %v921 = vpack.c.b16 %v551, %v549
    %v922 = vpack.c.b16 %v554, %v552
    %v923 = vpack.c.b16 %v555, %v553
    %v924 = vpack.c.b16 %v558, %v556
    %v925 = vpack.c.b16 %v559, %v557
    %v926 = vpack.c.b16 %v562, %v560
    %v927 = vpack.c.b16 %v563, %v561
    %v928 = vpack.c.b16 %v566, %v564
    %v929 = vpack.c.b16 %v567, %v565
    %v930 = vpack.c.b16 %v570, %v568
    %v931 = vpack.c.b16 %v571, %v569
    %v932 = vpack.c.b16 %v574, %v572
    %v933 = vpack.c.b16 %v575, %v573
    %v934 = vpack.c.b16 %v578, %v576
    %v935 = vpack.c.b16 %v579, %v577
    %v936 = vpack.c.b16 %v582, %v580
    %v937 = vpack.c.b16 %v583, %v581
    %v938 = vpack.c.b16 %v586, %v584
    %v939 = vpack.c.b16 %v587, %v585
    %v940 = vpack.c.b16 %v590, %v588
    %v941 = vpack.c.b16 %v591, %v589
    %v942 = vpack.c.b16 %v594, %v592
    %v943 = vpack.c.b16 %v595, %v593
    %v944 = vpack.c.b16 %v598, %v596
    %v945 = vpack.c.b16 %v599, %v597
    %v946 = vpack.c.b16 %v602, %v600
    %v947 = vpack.c.b16 %v603, %v601
    %v948 = vpack.c.b16 %v606, %v604
    %v949 = vpack.c.b16 %v607, %v605
    %v950 = vpack.c.b16 %v610, %v608
    %v951 = vpack.c.b16 %v611, %v609
    %v952 = vpack.c.b16 %v614, %v612
    %v953 = vpack.c.b16 %v615, %v613
    %v954 = vpack.c.b16 %v618, %v616
    %v955 = vpack.c.b16 %v619, %v617
    %v956 = vpack.c.b16 %v622, %v620
    %v957 = vpack.c.b16 %v623, %v621
    %v958 = vpack.c.b16 %v626, %v624
    %v959 = vpack.c.b16 %v627, %v625
    %v960 = vpack.c.b16 %v630, %v628
    %v961 = vpack.c.b16 %v631, %v629
    %v962 = vpack.c.b16 %v634, %v632
    %v963 = vpack.c.b16 %v635, %v633
    %v964 = vpack.c.b16 %v638, %v636
    %v965 = vpack.c.b16 %v639, %v637
    %v966 = vpack.c.b16 %v642, %v640
    %v967 = vpack.c.b16 %v643, %v641
    %v968 = vpack.c.b16 %v646, %v644
    %v969 = vpack.c.b16 %v647, %v645
    %v970 = vpack.c.b16 %v650, %v648
    %v971 = vpack.c.b16 %v651, %v649
    %v972 = vpack.c.b16 %v654, %v652
    %v973 = vpack.c.b16 %v655, %v653
    %v974 = vpack.c.b16 %v658, %v656
    %v975 = vpack.c.b16 %v659, %v657
    %v976 = vpack.c.b16 %v662, %v660
    %v977 = vpack.c.b16 %v663, %v661
    %v978 = vpack.c.b16 %v666, %v664
    %v979 = vpack.c.b16 %v667, %v665
    %v980 = vpack.c.b16 %v670, %v668
    %v981 = vpack.c.b16 %v671, %v669
    %v982 = vpack.c.b16 %v674, %v672
    %v983 = vpack.c.b16 %v675, %v673
    %v984 = vpack.c.b16 %v678, %v676
    %v985 = vpack.c.b16 %v679, %v677
    %v986 = vpack.c.b16 %v682, %v680
    %v987 = vpack.c.b16 %v683, %v681
    %v988 = vpack.c.b16 %v686, %v684
    %v989 = vpack.c.b16 %v687, %v685
    %v990 = vpack.c.b16 %v690, %v688
    %v991 = vpack.c.b16 %v691, %v689
    %v992 = vpack.c.b16 %v694, %v692
    %v993 = vpack.c.b16 %v695, %v693
    %v994 = vpack.c.b16 %v698, %v696
    %v995 = vpack.c.b16 %v699, %v697
    %v996 = vpack.c.b16 %v702, %v700
    %v997 = vpack.c.b16 %v703, %v701
    %v998 = vpack.c.b16 %v706, %v704
    %v999 = vpack.c.b16 %v707, %v705
    %v1000 = vpack.c.b16 %v710, %v708
    %v1001 = vpack.c.b16 %v711, %v709
    %v1002 = vpack.c.b16 %v714, %v712
    %v1003 = vpack.c.b16 %v715, %v713
    %v1004 = vpack.c.b16 %v718, %v716
    %v1005 = vpack.c.b16 %v719, %v717
    %v1006 = vpack.c.b16 %v722, %v720
    %v1007 = vpack.c.b16 %v723, %v721
    %v1008 = vpack.c.b16 %v726, %v724
    %v1009 = vpack.c.b16 %v727, %v725
    %v1010 = vpack.c.b16 %v730, %v728
    %v1011 = vpack.c.b16 %v731, %v729
    %v1012 = vpack.c.b16 %v734, %v732
    %v1013 = vpack.c.b16 %v735, %v733
    %v1014 = vpack.c.b16 %v738, %v736
    %v1015 = vpack.c.b16 %v739, %v737
    %v1016 = vpack.c.b16 %v742, %v740
    %v1017 = vpack.c.b16 %v743, %v741
    %v1018 = vpack.c.b16 %v746, %v744
    %v1019 = vpack.c.b16 %v747, %v745
    %v1020 = vpack.c.b16 %v750, %v748
    %v1021 = vpack.c.b16 %v751, %v749
    %v1022 = vpack.c.b16 %v754, %v752
    %v1023 = vpack.c.b16 %v755, %v753
    %v1024 = vpack.c.b16 %v758, %v756
    %v1025 = vpack.c.b16 %v759, %v757
    %v1026 = vpack.c.b16 %v762, %v760
    %v1027 = vpack.c.b16 %v763, %v761
    %v1028 = vpack.c.b16 %v766, %v764
    %v1029 = vpack.c.b16 %v767, %v765
    %v1030 = vpack.c.b16 %v770, %v768
    %v1031 = vpack.c.b16 %v771, %v769
    %v1032 = vpack.c.b16 %v774, %v772
    %v1033 = vpack.c.b16 %v775, %v773
    %v1034 = vpack.c.b16 %v778, %v776
    %v1035 = vpack.c.b16 %v779, %v777
    %v1036 = vpack.c.b16 %v782, %v780
    %v1037 = vpack.c.b16 %v783, %v781
    %v1038 = vpack.c.b16 %v786, %v784
    %v1039 = vpack.c.b16 %v787, %v785
    %v1040 = vpack.c.b16 %v790, %v788
    %v1041 = vpack.c.b16 %v791, %v789
    %v1042 = vpack.c.b16 %v794, %v792
    %v1043 = vpack.c.b16 %v795, %v793
    %v1044 = vpack.c.b16 %v798, %v796
    %v1045 = vpack.c.b16 %v799, %v797
    %v1046 = vpack.c.b16 %v802, %v800
    %v1047 = vpack.c.b16 %v803, %v801
    %v1048 = vpack.c.b16 %v806, %v804
    %v1049 = vpack.c.b16 %v807, %v805
    %v1050 = vpack.c.b16 %v810, %v808
    %v1051 = vpack.c.b16 %v811, %v809
    %v1052 = vpack.c.b16 %v814, %v812
    %v1053 = vpack.c.b16 %v815, %v813
    %v1054 = vpack.c.b16 %v818, %v816
    %v1055 = vpack.c.b16 %v819, %v817
    %v1056 = vpack.c.b16 %v822, %v820
    %v1057 = vpack.c.b16 %v823, %v821
    %v1058 = vpack.c.b16 %v826, %v824
    %v1059 = vpack.c.b16 %v827, %v825
    %v1060 = vpack.c.b16 %v830, %v828
    %v1061 = vpack.c.b16 %v831, %v829
    %v1062 = vpack.c.b16 %v834, %v832
    %v1063 = vpack.c.b16 %v835, %v833
    %v1064 = vpack.c.b16 %v838, %v836
    %v1065 = vpack.c.b16 %v839, %v837
    %v1066 = vpack.c.b16 %v842, %v840
    %v1067 = vpack.c.b16 %v843, %v841
    %v1068 = vpack.c.b16 %v846, %v844
    %v1069 = vpack.c.b16 %v847, %v845
    %v1070 = vpack.c.b16 %v850, %v848
    %v1071 = vpack.c.b16 %v851, %v849
    %v1072 = vpack.c.b16 %v854, %v852
    %v1073 = vpack.c.b16 %v855, %v853
    %v1074 = vpack.c.b16 %v858, %v856
    %v1075 = vpack.c.b16 %v859, %v857
    %v1076 = vpack.c.b16 %v862, %v860
    %v1077 = vpack.c.b16 %v863, %v861
    %v1078 = vpack.c.b16 %v866, %v864
    %v1079 = vpack.c.b16 %v867, %v865
    %v1080 = vpack.c.b16 %v870, %v868
    %v1081 = vpack.c.b16 %v871, %v869
    %v1082 = vpack.c.b16 %v874, %v872
    %v1083 = vpack.c.b16 %v875, %v873
    %v1084 = vpack.c.b16 %v878, %v876
    %v1085 = vpack.c.b16 %v879, %v877
    %v1086 = vpack.c.b16 %v882, %v880
    %v1087 = vpack.c.b16 %v883, %v881
    %v1088 = vpack.c.b16 %v886, %v884
    %v1089 = vpack.c.b16 %v887, %v885
    %v1090 = vpack.c.b16 %v890, %v888
    %v1091 = vpack.c.b16 %v891, %v889
    %v1092 = vpack.c.b16 %v894, %v892
    %v1093 = vpack.c.b16 %v895, %v893
    %v1094 = vpack.c.b16 %v898, %v896
    %v1095 = vpack.c.b16 %v899, %v897
    %v1096 = vpack.c.b16 %v902, %v900
    %v1097 = vpack.c.b16 %v903, %v901
    %v1098 = vpack.c.b16 %v906, %v904
    %v1099 = vpack.c.b16 %v907, %v905
    %1292 = vmatprep.subr.bf16.mxu0 %v909
    %1293 = vmatpush1.bf16.msra.mxu0 %v908
    %1294 = vmatprep.subr.bf16.mxu0 %v911
    %1295 = vmatpush1.bf16.msra.mxu0 %v910
    %1296 = vmatprep.subr.bf16.mxu0 %v913
    %1297 = vmatpush1.bf16.msra.mxu0 %v912
    %1298 = vmatprep.subr.bf16.mxu0 %v915
    %1299 = vmatpush1.bf16.msra.mxu0 %v914
    %1300 = vmatprep.subr.bf16.mxu0 %v917
    %1301 = vmatpush1.bf16.msra.mxu0 %v916
    %1302 = vmatprep.subr.bf16.mxu0 %v919
    %1303 = vmatpush1.bf16.msra.mxu0 %v918
    %1304 = vmatprep.subr.bf16.mxu0 %v921
    %1305 = vmatpush1.bf16.msra.mxu0 %v920
    %1306 = vmatprep.subr.bf16.mxu0 %v923
    %1307 = vmatpush1.bf16.msra.mxu0 %v922
    %1308 = vmatprep.subr.bf16.mxu0 %v925
    %1309 = vmatpush1.bf16.msra.mxu0 %v924
    %1310 = vmatprep.subr.bf16.mxu0 %v927
    %1311 = vmatpush1.bf16.msra.mxu0 %v926
    %1312 = vmatprep.subr.bf16.mxu0 %v929
    %1313 = vmatpush1.bf16.msra.mxu0 %v928
    %1314 = vmatprep.subr.bf16.mxu0 %v931
    %1315 = vmatpush1.bf16.msra.mxu0 %v930
    %1316 = vmatprep.subr.bf16.mxu0 %v933
    %1317 = vmatpush1.bf16.msra.mxu0 %v932
    %1318 = vmatprep.subr.bf16.mxu0 %v935
    %1319 = vmatpush1.bf16.msra.mxu0 %v934
    %1320 = vmatprep.subr.bf16.mxu0 %v937
    %1321 = vmatpush1.bf16.msra.mxu0 %v936
    %1322 = vmatprep.subr.bf16.mxu0 %v939
    %1323 = vmatpush1.bf16.msra.mxu0 %v938
    %1324 = vmatprep.mubr.bf16.mxu0 %v309
    %1325 = vmatmul.mubr.bf16.gmra.mrb[0].mxu0 %v308
    %v1326 = vpop.f32.mrb[0].mxu0
    %v1327 = vadd.f32 %v265, %v1326
    %v1328 = vpop.f32.mrb[0].mxu0
    %v1329 = vadd.f32 %v269, %v1328
    %v1330 = vpop.f32.mrb[0].mxu0
    %v1331 = vadd.f32 %v265, %v1330
    %v1332 = vpop.f32.mrb[0].mxu0
    %v1333 = vadd.f32 %v269, %v1332
    %1334 = vdwg.mxu0
    %1335 = vmatprep.subr.bf16.mxu0 %v941
    %1336 = vmatpush1.bf16.msra.mxu0 %v940
    %1337 = vmatprep.subr.bf16.mxu0 %v943
    %1338 = vmatpush1.bf16.msra.mxu0 %v942
    %1339 = vmatprep.subr.bf16.mxu0 %v945
    %1340 = vmatpush1.bf16.msra.mxu0 %v944
    %1341 = vmatprep.subr.bf16.mxu0 %v947
    %1342 = vmatpush1.bf16.msra.mxu0 %v946
    %1343 = vmatprep.subr.bf16.mxu0 %v949
    %1344 = vmatpush1.bf16.msra.mxu0 %v948
    %1345 = vmatprep.subr.bf16.mxu0 %v951
    %1346 = vmatpush1.bf16.msra.mxu0 %v950
    %1347 = vmatprep.subr.bf16.mxu0 %v953
    %1348 = vmatpush1.bf16.msra.mxu0 %v952
    %1349 = vmatprep.subr.bf16.mxu0 %v955
    %1350 = vmatpush1.bf16.msra.mxu0 %v954
    %1351 = vmatprep.subr.bf16.mxu0 %v957
    %1352 = vmatpush1.bf16.msra.mxu0 %v956
    %1353 = vmatprep.subr.bf16.mxu0 %v959
    %1354 = vmatpush1.bf16.msra.mxu0 %v958
    %1355 = vmatprep.subr.bf16.mxu0 %v961
    %1356 = vmatpush1.bf16.msra.mxu0 %v960
    %1357 = vmatprep.subr.bf16.mxu0 %v963
    %1358 = vmatpush1.bf16.msra.mxu0 %v962
    %1359 = vmatprep.subr.bf16.mxu0 %v965
    %1360 = vmatpush1.bf16.msra.mxu0 %v964
    %1361 = vmatprep.subr.bf16.mxu0 %v967
    %1362 = vmatpush1.bf16.msra.mxu0 %v966
    %1363 = vmatprep.subr.bf16.mxu0 %v969
    %1364 = vmatpush1.bf16.msra.mxu0 %v968
    %1365 = vmatprep.subr.bf16.mxu0 %v971
    %1366 = vmatpush1.bf16.msra.mxu0 %v970
    %1367 = vmatprep.mubr.bf16.mxu0 %v311
    %1368 = vmatmul.mubr.bf16.gmra.mrb[0].mxu0 %v310
    %v1369 = vpop.f32.mrb[0].mxu0
    %v1370 = vadd.f32 %v1327, %v1369
    %v1371 = vpop.f32.mrb[0].mxu0
    %v1372 = vadd.f32 %v1329, %v1371
    %v1373 = vpop.f32.mrb[0].mxu0
    %v1374 = vadd.f32 %v1331, %v1373
    %v1375 = vpop.f32.mrb[0].mxu0
    %v1376 = vadd.f32 %v1333, %v1375
    %1377 = vdwg.mxu0
    %1378 = vmatprep.subr.bf16.mxu0 %v973
    %1379 = vmatpush1.bf16.msra.mxu0 %v972
    %1380 = vmatprep.subr.bf16.mxu0 %v975
    %1381 = vmatpush1.bf16.msra.mxu0 %v974
    %1382 = vmatprep.subr.bf16.mxu0 %v977
    %1383 = vmatpush1.bf16.msra.mxu0 %v976
    %1384 = vmatprep.subr.bf16.mxu0 %v979
    %1385 = vmatpush1.bf16.msra.mxu0 %v978
    %1386 = vmatprep.subr.bf16.mxu0 %v981
    %1387 = vmatpush1.bf16.msra.mxu0 %v980
    %1388 = vmatprep.subr.bf16.mxu0 %v983
    %1389 = vmatpush1.bf16.msra.mxu0 %v982
    %1390 = vmatprep.subr.bf16.mxu0 %v985
    %1391 = vmatpush1.bf16.msra.mxu0 %v984
    %1392 = vmatprep.subr.bf16.mxu0 %v987
    %1393 = vmatpush1.bf16.msra.mxu0 %v986
    %1394 = vmatprep.subr.bf16.mxu0 %v989
    %1395 = vmatpush1.bf16.msra.mxu0 %v988
    %1396 = vmatprep.subr.bf16.mxu0 %v991
    %1397 = vmatpush1.bf16.msra.mxu0 %v990
    %1398 = vmatprep.subr.bf16.mxu0 %v993
    %1399 = vmatpush1.bf16.msra.mxu0 %v992
    %1400 = vmatprep.subr.bf16.mxu0 %v995
    %1401 = vmatpush1.bf16.msra.mxu0 %v994
    %1402 = vmatprep.subr.bf16.mxu0 %v997
    %1403 = vmatpush1.bf16.msra.mxu0 %v996
    %1404 = vmatprep.subr.bf16.mxu0 %v999
    %1405 = vmatpush1.bf16.msra.mxu0 %v998
    %1406 = vmatprep.subr.bf16.mxu0 %v1001
    %1407 = vmatpush1.bf16.msra.mxu0 %v1000
    %1408 = vmatprep.subr.bf16.mxu0 %v1003
    %1409 = vmatpush1.bf16.msra.mxu0 %v1002
    %1410 = vmatprep.mubr.bf16.mxu0 %v313
    %1411 = vmatmul.mubr.bf16.gmra.mrb[0].mxu0 %v312
    %v1412 = vpop.f32.mrb[0].mxu0
    %v1413 = vadd.f32 %v1370, %v1412
    %v1414 = vpop.f32.mrb[0].mxu0
    %v1415 = vadd.f32 %v1372, %v1414
    %v1416 = vpop.f32.mrb[0].mxu0
    %v1417 = vadd.f32 %v1374, %v1416
    %v1418 = vpop.f32.mrb[0].mxu0
    %v1419 = vadd.f32 %v1376, %v1418
    %1420 = vdwg.mxu0
    %1421 = vmatprep.subr.bf16.mxu0 %v1005
    %1422 = vmatpush1.bf16.msra.mxu0 %v1004
    %1423 = vmatprep.subr.bf16.mxu0 %v1007
    %1424 = vmatpush1.bf16.msra.mxu0 %v1006
    %1425 = vmatprep.subr.bf16.mxu0 %v1009
    %1426 = vmatpush1.bf16.msra.mxu0 %v1008
    %1427 = vmatprep.subr.bf16.mxu0 %v1011
    %1428 = vmatpush1.bf16.msra.mxu0 %v1010
    %1429 = vmatprep.subr.bf16.mxu0 %v1013
    %1430 = vmatpush1.bf16.msra.mxu0 %v1012
    %1431 = vmatprep.subr.bf16.mxu0 %v1015
    %1432 = vmatpush1.bf16.msra.mxu0 %v1014
    %1433 = vmatprep.subr.bf16.mxu0 %v1017
    %1434 = vmatpush1.bf16.msra.mxu0 %v1016
    %1435 = vmatprep.subr.bf16.mxu0 %v1019
    %1436 = vmatpush1.bf16.msra.mxu0 %v1018
    %1437 = vmatprep.subr.bf16.mxu0 %v1021
    %1438 = vmatpush1.bf16.msra.mxu0 %v1020
    %1439 = vmatprep.subr.bf16.mxu0 %v1023
    %1440 = vmatpush1.bf16.msra.mxu0 %v1022
    %1441 = vmatprep.subr.bf16.mxu0 %v1025
    %1442 = vmatpush1.bf16.msra.mxu0 %v1024
    %1443 = vmatprep.subr.bf16.mxu0 %v1027
    %1444 = vmatpush1.bf16.msra.mxu0 %v1026
    %1445 = vmatprep.subr.bf16.mxu0 %v1029
    %1446 = vmatpush1.bf16.msra.mxu0 %v1028
    %1447 = vmatprep.subr.bf16.mxu0 %v1031
    %1448 = vmatpush1.bf16.msra.mxu0 %v1030
    %1449 = vmatprep.subr.bf16.mxu0 %v1033
    %1450 = vmatpush1.bf16.msra.mxu0 %v1032
    %1451 = vmatprep.subr.bf16.mxu0 %v1035
    %1452 = vmatpush1.bf16.msra.mxu0 %v1034
    %1453 = vmatprep.mubr.bf16.mxu0 %v315
    %1454 = vmatmul.mubr.bf16.gmra.mrb[0].mxu0 %v314
    %v1455 = vpop.f32.mrb[0].mxu0
    %v1456 = vadd.f32 %v1413, %v1455
    %v1457 = vpop.f32.mrb[0].mxu0
    %v1458 = vadd.f32 %v1415, %v1457
    %v1459 = vpop.f32.mrb[0].mxu0
    %v1460 = vadd.f32 %v1417, %v1459
    %v1461 = vpop.f32.mrb[0].mxu0
    %v1462 = vadd.f32 %v1419, %v1461
    %1463 = vdwg.mxu0
    %1464 = vmatprep.subr.bf16.mxu0 %v1037
    %1465 = vmatpush1.bf16.msra.mxu0 %v1036
    %1466 = vmatprep.subr.bf16.mxu0 %v1039
    %1467 = vmatpush1.bf16.msra.mxu0 %v1038
    %1468 = vmatprep.subr.bf16.mxu0 %v1041
    %1469 = vmatpush1.bf16.msra.mxu0 %v1040
    %1470 = vmatprep.subr.bf16.mxu0 %v1043
    %1471 = vmatpush1.bf16.msra.mxu0 %v1042
    %1472 = vmatprep.subr.bf16.mxu0 %v1045
    %1473 = vmatpush1.bf16.msra.mxu0 %v1044
    %1474 = vmatprep.subr.bf16.mxu0 %v1047
    %1475 = vmatpush1.bf16.msra.mxu0 %v1046
    %1476 = vmatprep.subr.bf16.mxu0 %v1049
    %1477 = vmatpush1.bf16.msra.mxu0 %v1048
    %1478 = vmatprep.subr.bf16.mxu0 %v1051
    %1479 = vmatpush1.bf16.msra.mxu0 %v1050
    %1480 = vmatprep.subr.bf16.mxu0 %v1053
    %1481 = vmatpush1.bf16.msra.mxu0 %v1052
    %1482 = vmatprep.subr.bf16.mxu0 %v1055
    %1483 = vmatpush1.bf16.msra.mxu0 %v1054
    %1484 = vmatprep.subr.bf16.mxu0 %v1057
    %1485 = vmatpush1.bf16.msra.mxu0 %v1056
    %1486 = vmatprep.subr.bf16.mxu0 %v1059
    %1487 = vmatpush1.bf16.msra.mxu0 %v1058
    %1488 = vmatprep.subr.bf16.mxu0 %v1061
    %1489 = vmatpush1.bf16.msra.mxu0 %v1060
    %1490 = vmatprep.subr.bf16.mxu0 %v1063
    %1491 = vmatpush1.bf16.msra.mxu0 %v1062
    %1492 = vmatprep.subr.bf16.mxu0 %v1065
    %1493 = vmatpush1.bf16.msra.mxu0 %v1064
    %1494 = vmatprep.subr.bf16.mxu0 %v1067
    %1495 = vmatpush1.bf16.msra.mxu0 %v1066
    %1496 = vmatprep.mubr.bf16.mxu0 %v317
    %1497 = vmatmul.mubr.bf16.gmra.mrb[0].mxu0 %v316
    %v1498 = vpop.f32.mrb[0].mxu0
    %v1499 = vadd.f32 %v1456, %v1498
    %v1500 = vpop.f32.mrb[0].mxu0
    %v1501 = vadd.f32 %v1458, %v1500
    %v1502 = vpop.f32.mrb[0].mxu0
    %v1503 = vadd.f32 %v1460, %v1502
    %v1504 = vpop.f32.mrb[0].mxu0
    %v1505 = vadd.f32 %v1462, %v1504
    %1506 = vdwg.mxu0
    %1507 = vmatprep.subr.bf16.mxu0 %v1069
    %1508 = vmatpush1.bf16.msra.mxu0 %v1068
    %1509 = vmatprep.subr.bf16.mxu0 %v1071
    %1510 = vmatpush1.bf16.msra.mxu0 %v1070
    %1511 = vmatprep.subr.bf16.mxu0 %v1073
    %1512 = vmatpush1.bf16.msra.mxu0 %v1072
    %1513 = vmatprep.subr.bf16.mxu0 %v1075
    %1514 = vmatpush1.bf16.msra.mxu0 %v1074
    %1515 = vmatprep.subr.bf16.mxu0 %v1077
    %1516 = vmatpush1.bf16.msra.mxu0 %v1076
    %1517 = vmatprep.subr.bf16.mxu0 %v1079
    %1518 = vmatpush1.bf16.msra.mxu0 %v1078
    %1519 = vmatprep.subr.bf16.mxu0 %v1081
    %1520 = vmatpush1.bf16.msra.mxu0 %v1080
    %1521 = vmatprep.subr.bf16.mxu0 %v1083
    %1522 = vmatpush1.bf16.msra.mxu0 %v1082
    %1523 = vmatprep.subr.bf16.mxu0 %v1085
    %1524 = vmatpush1.bf16.msra.mxu0 %v1084
    %1525 = vmatprep.subr.bf16.mxu0 %v1087
    %1526 = vmatpush1.bf16.msra.mxu0 %v1086
    %1527 = vmatprep.subr.bf16.mxu0 %v1089
    %1528 = vmatpush1.bf16.msra.mxu0 %v1088
    %1529 = vmatprep.subr.bf16.mxu0 %v1091
    %1530 = vmatpush1.bf16.msra.mxu0 %v1090
    %1531 = vmatprep.subr.bf16.mxu0 %v1093
    %1532 = vmatpush1.bf16.msra.mxu0 %v1092
    %1533 = vmatprep.subr.bf16.mxu0 %v1095
    %1534 = vmatpush1.bf16.msra.mxu0 %v1094
    %1535 = vmatprep.subr.bf16.mxu0 %v1097
    %1536 = vmatpush1.bf16.msra.mxu0 %v1096
    %1537 = vmatprep.subr.bf16.mxu0 %v1099
    %1538 = vmatpush1.bf16.msra.mxu0 %v1098
    %1539 = vmatprep.mubr.bf16.mxu0 %v319
    %1540 = vmatmul.mubr.bf16.gmra.mrb[0].mxu0 %v318
    %v1541 = vpop.f32.mrb[0].mxu0
    %v1542 = vadd.f32 %v1499, %v1541
    %v1543 = vpop.f32.mrb[0].mxu0
    %v1544 = vadd.f32 %v1501, %v1543
    %v1545 = vpop.f32.mrb[0].mxu0
    %v1546 = vadd.f32 %v1503, %v1545
    %v1547 = vpop.f32.mrb[0].mxu0
    %v1548 = vadd.f32 %v1505, %v1547
    %1549 = vdwg.mxu0
    %v1550 = vld [vmem:[%s3] sm:$0xff]
    %v1551 = vld [vmem:[%s3 + $0x8] sm:$0xff]
    %v1552 = vld [vmem:[%s3 + $0x10] sm:$0xff]
    %v1553 = vld [vmem:[%s3 + $0x18] sm:$0xff]
    %v1554 = vld [vmem:[%s3 + $0x20] sm:$0xff]
    %v1555 = vld [vmem:[%s3 + $0x28] sm:$0xff]
    %v1556 = vld [vmem:[%s3 + $0x30] sm:$0xff]
    %v1557 = vld [vmem:[%s3 + $0x38] sm:$0xff]
    %v1558 = vld [vmem:[%s3 + $0x40] sm:$0xff]
    %v1559 = vld [vmem:[%s3 + $0x48] sm:$0xff]
    %v1560 = vld [vmem:[%s3 + $0x50] sm:$0xff]
    %v1561 = vld [vmem:[%s3 + $0x58] sm:$0xff]
    %v1562 = vld [vmem:[%s3 + $0x60] sm:$0xff]
    %v1563 = vld [vmem:[%s3 + $0x68] sm:$0xff]
    %v1564 = vld [vmem:[%s3 + $0x70] sm:$0xff]
    %v1565 = vld [vmem:[%s3 + $0x78] sm:$0xff]
    %v1566 = vld [vmem:[%s3 + $0x80] sm:$0xff]
    %v1567 = vld [vmem:[%s3 + $0x88] sm:$0xff]
    %v1568 = vld [vmem:[%s3 + $0x90] sm:$0xff]
    %v1569 = vld [vmem:[%s3 + $0x98] sm:$0xff]
    %v1570 = vld [vmem:[%s3 + $0xa0] sm:$0xff]
    %v1571 = vld [vmem:[%s3 + $0xa8] sm:$0xff]
    %v1572 = vld [vmem:[%s3 + $0xb0] sm:$0xff]
    %v1573 = vld [vmem:[%s3 + $0xb8] sm:$0xff]
    %v1574 = vld [vmem:[%s3 + $0xc0] sm:$0xff]
    %v1575 = vld [vmem:[%s3 + $0xc8] sm:$0xff]
    %v1576 = vld [vmem:[%s3 + $0xd0] sm:$0xff]
    %v1577 = vld [vmem:[%s3 + $0xd8] sm:$0xff]
    %v1578 = vld [vmem:[%s3 + $0xe0] sm:$0xff]
    %v1579 = vld [vmem:[%s3 + $0xe8] sm:$0xff]
    %v1580 = vld [vmem:[%s3 + $0xf0] sm:$0xff]
    %v1581 = vld [vmem:[%s3 + $0xf8] sm:$0xff]
    %v1582 = vld [vmem:[%s4] sm:$0x1]
    %v1584 = vlaneseq
    %v1585 = vshrl.u32 %v1584, 7
    %v1586 = vsub.s32 0, %v1585
    %v1587 = vrot.slane %v1582, %v1586
    %1589 = vmatprep.subr.mxu0 0.0
    %1590 = vmatpush1.msra.mxu0 %v1550
    %1591 = vmatprep.subr.mxu0 0.0
    %1592 = vmatpush1.msra.mxu0 %v1551
    %1593 = vmatprep.subr.mxu0 0.0
    %1594 = vmatpush1.msra.mxu0 %v1552
    %1595 = vmatprep.subr.mxu0 0.0
    %1596 = vmatpush1.msra.mxu0 %v1553
    %1597 = vmatprep.subr.mxu0 0.0
    %1598 = vmatpush1.msra.mxu0 %v1554
    %1599 = vmatprep.subr.mxu0 0.0
    %1600 = vmatpush1.msra.mxu0 %v1555
    %1601 = vmatprep.subr.mxu0 0.0
    %1602 = vmatpush1.msra.mxu0 %v1556
    %1603 = vmatprep.subr.mxu0 0.0
    %1604 = vmatpush1.msra.mxu0 %v1557
    %1605 = vmatprep.subr.mxu0 0.0
    %1606 = vmatpush1.msra.mxu0 %v1558
    %1607 = vmatprep.subr.mxu0 0.0
    %1608 = vmatpush1.msra.mxu0 %v1559
    %1609 = vmatprep.subr.mxu0 0.0
    %1610 = vmatpush1.msra.mxu0 %v1560
    %1611 = vmatprep.subr.mxu0 0.0
    %1612 = vmatpush1.msra.mxu0 %v1561
    %1613 = vmatprep.subr.mxu0 0.0
    %1614 = vmatpush1.msra.mxu0 %v1562
    %1615 = vmatprep.subr.mxu0 0.0
    %1616 = vmatpush1.msra.mxu0 %v1563
    %1617 = vmatprep.subr.mxu0 0.0
    %1618 = vmatpush1.msra.mxu0 %v1564
    %1619 = vmatprep.subr.mxu0 0.0
    %1620 = vmatpush1.msra.mxu0 %v1565
    %1621 = vmatprep.subr.mxu0 0.0
    %1622 = vmatpush1.msra.mxu0 %v1566
    %1623 = vmatprep.subr.mxu0 0.0
    %1624 = vmatpush1.msra.mxu0 %v1567
    %1625 = vmatprep.subr.mxu0 0.0
    %1626 = vmatpush1.msra.mxu0 %v1568
    %1627 = vmatprep.subr.mxu0 0.0
    %1628 = vmatpush1.msra.mxu0 %v1569
    %1629 = vmatprep.subr.mxu0 0.0
    %1630 = vmatpush1.msra.mxu0 %v1570
    %1631 = vmatprep.subr.mxu0 0.0
    %1632 = vmatpush1.msra.mxu0 %v1571
    %1633 = vmatprep.subr.mxu0 0.0
    %1634 = vmatpush1.msra.mxu0 %v1572
    %1635 = vmatprep.subr.mxu0 0.0
    %1636 = vmatpush1.msra.mxu0 %v1573
    %1637 = vmatprep.subr.mxu0 0.0
    %1638 = vmatpush1.msra.mxu0 %v1574
    %1639 = vmatprep.subr.mxu0 0.0
    %1640 = vmatpush1.msra.mxu0 %v1575
    %1641 = vmatprep.subr.mxu0 0.0
    %1642 = vmatpush1.msra.mxu0 %v1576
    %1643 = vmatprep.subr.mxu0 0.0
    %1644 = vmatpush1.msra.mxu0 %v1577
    %1645 = vmatprep.subr.mxu0 0.0
    %1646 = vmatpush1.msra.mxu0 %v1578
    %1647 = vmatprep.subr.mxu0 0.0
    %1648 = vmatpush1.msra.mxu0 %v1579
    %1649 = vmatprep.subr.mxu0 0.0
    %1650 = vmatpush1.msra.mxu0 %v1580
    %1651 = vmatprep.subr.mxu0 0.0
    %1652 = vmatpush1.msra.mxu0 %v1581
    %1653 = vmatprep.mubr.f32.mxu0 %v1544
    %1654 = vmatmul.mubr.f32.gmra.mrb[0].mxu0 %v1542
    %v1655 = vpop.f32.mrb[0].mxu0
    %v1656 = vadd.f32 %v1587, %v1655
    %v1657 = vpop.f32.mrb[0].mxu0
    %1658 = vmatprep.mubr.f32.mxu0 %v1548
    %1659 = vmatmul.mubr.f32.gmra.mrb[0].mxu0 %v1546
    %v1660 = vpop.f32.mrb[0].mxu0
    %v1661 = vadd.f32 %v1587, %v1660
    %v1662 = vpop.f32.mrb[0].mxu0
    %1663 = vdwg.mxu0
    %vm1664 = vcmask 23552
    %v1665 = vsel %vm1664, %v1656, -inf
    %1666 = vmax.xlane.f32.xlu0 %v1665
    %v1667 = vpop.xlane.xlu0 %1666
    %v1668 = vsel %vm1664, %v1661, -inf
    %1669 = vmax.xlane.f32.xlu0 %v1668
    %v1670 = vpop.xlane.xlu0 %1669
    %v1671 = vsub.f32 %v1656, %v1667
    %v1672 = vsub.f32 %v1661, %v1670
    %v1673 = vmul.f32 %v1671, 1.442695
    %v1674 = vpow.pop %v1673
    %v1675 = vmul.f32 %v1672, 1.442695
    %v1676 = vpow.pop %v1675
    %v1677 = vsel %vm1664, %v1674, 0.0
    %1678 = vadd.xlane.f32.xlu0 %v1677
    %v1679 = vpop.xlane.xlu0 %1678
    %v1680 = vsel %vm1664, %v1676, 0.0
    %1681 = vadd.xlane.f32.xlu0 %v1680
    %v1682 = vpop.xlane.xlu0 %1681
    %v1683 = vrcp.pop %v1679
    %v1684 = vrcp.pop %v1682
    %v1685 = vmul.f32 %v1674, %v1683
    %v1686 = vmul.f32 %v1676, %v1684
    %v1687 = vunpack.c.l.bf16 %v56
    %v1688 = vunpack.c.h.bf16 %v56
    %v1689 = vunpack.c.l.bf16 %v57
    %v1690 = vunpack.c.h.bf16 %v57
    %v1691 = vunpack.c.l.bf16 %v62
    %v1692 = vunpack.c.h.bf16 %v62
    %v1693 = vunpack.c.l.bf16 %v63
    %v1694 = vunpack.c.h.bf16 %v63
    %1696 = vset.pattern.permute.xlu0 0
    %1697 = vperm.xlu0 %1696, %v1685
    %v1698 = vpop.permute.xlu0 %1697
    %1701 = vset.pattern.permute.xlu0 0
    %1702 = vperm.xlu0 %1701, %v1686
    %v1703 = vpop.permute.xlu0 %1702
    %v1705 = vmul.f32 %v1698, %v1687
    %v1706 = vmul.f32 %v1698, %v1688
    %v1707 = vmul.f32 %v1698, %v1689
    %v1708 = vmul.f32 %v1698, %v1690
    %v1709 = vmul.f32 %v1703, %v1691
    %v1710 = vmul.f32 %v1703, %v1692
    %v1711 = vmul.f32 %v1703, %v1693
    %v1712 = vmul.f32 %v1703, %v1694
    %v1713 = vadd.f32 %v1705, 0.0
    %v1714 = vadd.f32 %v1706, 0.0
    %v1715 = vadd.f32 %v1707, 0.0
    %v1716 = vadd.f32 %v1708, 0.0
    %v1717 = vadd.f32 %v1709, 0.0
    %v1718 = vadd.f32 %v1710, 0.0
    %v1719 = vadd.f32 %v1711, 0.0
    %v1720 = vadd.f32 %v1712, 0.0
    %v1721 = vunpack.c.l.bf16 %v58
    %v1722 = vunpack.c.h.bf16 %v58
    %v1723 = vunpack.c.l.bf16 %v59
    %v1724 = vunpack.c.h.bf16 %v59
    %v1725 = vunpack.c.l.bf16 %v64
    %v1726 = vunpack.c.h.bf16 %v64
    %v1727 = vunpack.c.l.bf16 %v65
    %v1728 = vunpack.c.h.bf16 %v65
    %1729 = vset.pattern.permute.xlu0 1
    %1730 = vperm.xlu0 %1729, %v1685
    %v1731 = vpop.permute.xlu0 %1730
    %1733 = vset.pattern.permute.xlu0 1
    %1734 = vperm.xlu0 %1733, %v1686
    %v1735 = vpop.permute.xlu0 %1734
    %v1737 = vmul.f32 %v1731, %v1721
    %v1738 = vmul.f32 %v1731, %v1722
    %v1739 = vmul.f32 %v1731, %v1723
    %v1740 = vmul.f32 %v1731, %v1724
    %v1741 = vmul.f32 %v1735, %v1725
    %v1742 = vmul.f32 %v1735, %v1726
    %v1743 = vmul.f32 %v1735, %v1727
    %v1744 = vmul.f32 %v1735, %v1728
    %v1745 = vadd.f32 %v1713, %v1737
    %v1746 = vadd.f32 %v1714, %v1738
    %v1747 = vadd.f32 %v1715, %v1739
    %v1748 = vadd.f32 %v1716, %v1740
    %v1749 = vadd.f32 %v1717, %v1741
    %v1750 = vadd.f32 %v1718, %v1742
    %v1751 = vadd.f32 %v1719, %v1743
    %v1752 = vadd.f32 %v1720, %v1744
    %v1753 = vunpack.c.l.bf16 %v60
    %v1754 = vunpack.c.h.bf16 %v60
    %v1755 = vunpack.c.l.bf16 %v61
    %v1756 = vunpack.c.h.bf16 %v61
    %v1757 = vunpack.c.l.bf16 %v66
    %v1758 = vunpack.c.h.bf16 %v66
    %v1759 = vunpack.c.l.bf16 %v67
    %v1760 = vunpack.c.h.bf16 %v67
    %1761 = vset.pattern.permute.xlu0 2
    %1762 = vperm.xlu0 %1761, %v1685
    %v1763 = vpop.permute.xlu0 %1762
    %1765 = vset.pattern.permute.xlu0 2
    %1766 = vperm.xlu0 %1765, %v1686
    %v1767 = vpop.permute.xlu0 %1766
    %v1769 = vmul.f32 %v1763, %v1753
    %v1770 = vmul.f32 %v1763, %v1754
    %v1771 = vmul.f32 %v1763, %v1755
    %v1772 = vmul.f32 %v1763, %v1756
    %v1773 = vmul.f32 %v1767, %v1757
    %v1774 = vmul.f32 %v1767, %v1758
    %v1775 = vmul.f32 %v1767, %v1759
    %v1776 = vmul.f32 %v1767, %v1760
    %v1777 = vadd.f32 %v1745, %v1769
    %v1778 = vadd.f32 %v1746, %v1770
    %v1779 = vadd.f32 %v1747, %v1771
    %v1780 = vadd.f32 %v1748, %v1772
    %v1781 = vadd.f32 %v1749, %v1773
    %v1782 = vadd.f32 %v1750, %v1774
    %v1783 = vadd.f32 %v1751, %v1775
    %v1784 = vadd.f32 %v1752, %v1776
    %v1785 = vpack.c.bf16 %v1781, %v1777
    %v1786 = vpack.c.bf16 %v1782, %v1778
    %v1787 = vpack.c.bf16 %v1783, %v1779
    %v1788 = vpack.c.bf16 %v1784, %v1780
    %v1789 = vld [vmem:[%s5] sm:$0xf]
    %v1790 = vld [vmem:[%s5 + $0x4] sm:$0xf]
    %v1791 = vld [vmem:[%s5 + $0x8] sm:$0xf]
    %v1792 = vld [vmem:[%s5 + $0xc] sm:$0xf]
    %v1793 = vld [vmem:[%s5 + $0x10] sm:$0xf]
    %v1794 = vld [vmem:[%s5 + $0x14] sm:$0xf]
    %v1795 = vld [vmem:[%s5 + $0x18] sm:$0xf]
    %v1796 = vld [vmem:[%s5 + $0x1c] sm:$0xf]
    %v1797 = vld [vmem:[%s5 + $0x20] sm:$0xf]
    %v1798 = vld [vmem:[%s5 + $0x24] sm:$0xf]
    %v1799 = vld [vmem:[%s5 + $0x28] sm:$0xf]
    %v1800 = vld [vmem:[%s5 + $0x2c] sm:$0xf]
    %v1801 = vld [vmem:[%s5 + $0x30] sm:$0xf]
    %v1802 = vld [vmem:[%s5 + $0x34] sm:$0xf]
    %v1803 = vld [vmem:[%s5 + $0x38] sm:$0xf]
    %v1804 = vld [vmem:[%s5 + $0x3c] sm:$0xf]
    %v1805 = vld [vmem:[%s5 + $0x40] sm:$0xf]
    %v1806 = vld [vmem:[%s5 + $0x44] sm:$0xf]
    %v1807 = vld [vmem:[%s5 + $0x48] sm:$0xf]
    %v1808 = vld [vmem:[%s5 + $0x4c] sm:$0xf]
    %v1809 = vld [vmem:[%s5 + $0x50] sm:$0xf]
    %v1810 = vld [vmem:[%s5 + $0x54] sm:$0xf]
    %v1811 = vld [vmem:[%s5 + $0x58] sm:$0xf]
    %v1812 = vld [vmem:[%s5 + $0x5c] sm:$0xf]
    %v1813 = vld [vmem:[%s5 + $0x60] sm:$0xf]
    %v1814 = vld [vmem:[%s5 + $0x64] sm:$0xf]
    %v1815 = vld [vmem:[%s5 + $0x68] sm:$0xf]
    %v1816 = vld [vmem:[%s5 + $0x6c] sm:$0xf]
    %v1817 = vld [vmem:[%s5 + $0x70] sm:$0xf]
    %v1818 = vld [vmem:[%s5 + $0x74] sm:$0xf]
    %v1819 = vld [vmem:[%s5 + $0x78] sm:$0xf]
    %v1820 = vld [vmem:[%s5 + $0x7c] sm:$0xf]
    %v1821 = vld [vmem:[%s5 + $0x80] sm:$0xf]
    %v1822 = vld [vmem:[%s5 + $0x84] sm:$0xf]
    %v1823 = vld [vmem:[%s5 + $0x88] sm:$0xf]
    %v1824 = vld [vmem:[%s5 + $0x8c] sm:$0xf]
    %v1825 = vld [vmem:[%s5 + $0x90] sm:$0xf]
    %v1826 = vld [vmem:[%s5 + $0x94] sm:$0xf]
    %v1827 = vld [vmem:[%s5 + $0x98] sm:$0xf]
    %v1828 = vld [vmem:[%s5 + $0x9c] sm:$0xf]
    %v1829 = vld [vmem:[%s5 + $0xa0] sm:$0xf]
    %v1830 = vld [vmem:[%s5 + $0xa4] sm:$0xf]
    %v1831 = vld [vmem:[%s5 + $0xa8] sm:$0xf]
    %v1832 = vld [vmem:[%s5 + $0xac] sm:$0xf]
    %v1833 = vld [vmem:[%s5 + $0xb0] sm:$0xf]
    %v1834 = vld [vmem:[%s5 + $0xb4] sm:$0xf]
    %v1835 = vld [vmem:[%s5 + $0xb8] sm:$0xf]
    %v1836 = vld [vmem:[%s5 + $0xbc] sm:$0xf]
    %v1837 = vld [vmem:[%s5 + $0xc0] sm:$0xf]
    %v1838 = vld [vmem:[%s5 + $0xc4] sm:$0xf]
    %v1839 = vld [vmem:[%s5 + $0xc8] sm:$0xf]
    %v1840 = vld [vmem:[%s5 + $0xcc] sm:$0xf]
    %v1841 = vld [vmem:[%s5 + $0xd0] sm:$0xf]
    %v1842 = vld [vmem:[%s5 + $0xd4] sm:$0xf]
    %v1843 = vld [vmem:[%s5 + $0xd8] sm:$0xf]
    %v1844 = vld [vmem:[%s5 + $0xdc] sm:$0xf]
    %v1845 = vld [vmem:[%s5 + $0xe0] sm:$0xf]
    %v1846 = vld [vmem:[%s5 + $0xe4] sm:$0xf]
    %v1847 = vld [vmem:[%s5 + $0xe8] sm:$0xf]
    %v1848 = vld [vmem:[%s5 + $0xec] sm:$0xf]
    %v1849 = vld [vmem:[%s5 + $0xf0] sm:$0xf]
    %v1850 = vld [vmem:[%s5 + $0xf4] sm:$0xf]
    %v1851 = vld [vmem:[%s5 + $0xf8] sm:$0xf]
    %v1852 = vld [vmem:[%s5 + $0xfc] sm:$0xf]
    %v1853 = vld [vmem:[%s6] sm:$0x1]
    %v1855 = vlaneseq
    %v1856 = vshrl.u32 %v1855, 7
    %v1857 = vsub.s32 0, %v1856
    %v1858 = vrot.slane %v1853, %v1857
    %v1924 = vunpack.c.l.b16 %v1789
    %v1925 = vunpack.c.l.b16 %v1790
    %v1926 = vunpack.c.l.b16 %v1791
    %v1927 = vunpack.c.l.b16 %v1792
    %v1928 = vunpack.c.l.b16 %v1793
    %v1929 = vunpack.c.l.b16 %v1794
    %v1930 = vunpack.c.l.b16 %v1795
    %v1931 = vunpack.c.l.b16 %v1796
    %v1932 = vunpack.c.l.b16 %v1797
    %v1933 = vunpack.c.l.b16 %v1798
    %v1934 = vunpack.c.l.b16 %v1799
    %v1935 = vunpack.c.l.b16 %v1800
    %v1936 = vunpack.c.l.b16 %v1801
    %v1937 = vunpack.c.l.b16 %v1802
    %v1938 = vunpack.c.l.b16 %v1803
    %v1939 = vunpack.c.l.b16 %v1804
    %v1940 = vunpack.c.l.b16 %v1805
    %v1941 = vunpack.c.l.b16 %v1806
    %v1942 = vunpack.c.l.b16 %v1807
    %v1943 = vunpack.c.l.b16 %v1808
    %v1944 = vunpack.c.l.b16 %v1809
    %v1945 = vunpack.c.l.b16 %v1810
    %v1946 = vunpack.c.l.b16 %v1811
    %v1947 = vunpack.c.l.b16 %v1812
    %v1948 = vunpack.c.l.b16 %v1813
    %v1949 = vunpack.c.l.b16 %v1814
    %v1950 = vunpack.c.l.b16 %v1815
    %v1951 = vunpack.c.l.b16 %v1816
    %v1952 = vunpack.c.l.b16 %v1817
    %v1953 = vunpack.c.l.b16 %v1818
    %v1954 = vunpack.c.l.b16 %v1819
    %v1955 = vunpack.c.l.b16 %v1820
    %v1956 = vunpack.c.l.b16 %v1821
    %v1957 = vunpack.c.l.b16 %v1822
    %v1958 = vunpack.c.l.b16 %v1823
    %v1959 = vunpack.c.l.b16 %v1824
    %v1960 = vunpack.c.l.b16 %v1825
    %v1961 = vunpack.c.l.b16 %v1826
    %v1962 = vunpack.c.l.b16 %v1827
    %v1963 = vunpack.c.l.b16 %v1828
    %v1964 = vunpack.c.l.b16 %v1829
    %v1965 = vunpack.c.l.b16 %v1830
    %v1966 = vunpack.c.l.b16 %v1831
    %v1967 = vunpack.c.l.b16 %v1832
    %v1968 = vunpack.c.l.b16 %v1833
    %v1969 = vunpack.c.l.b16 %v1834
    %v1970 = vunpack.c.l.b16 %v1835
    %v1971 = vunpack.c.l.b16 %v1836
    %v1972 = vunpack.c.l.b16 %v1837
    %v1973 = vunpack.c.l.b16 %v1838
    %v1974 = vunpack.c.l.b16 %v1839
    %v1975 = vunpack.c.l.b16 %v1840
    %v1976 = vunpack.c.l.b16 %v1841
    %v1977 = vunpack.c.l.b16 %v1842
    %v1978 = vunpack.c.l.b16 %v1843
    %v1979 = vunpack.c.l.b16 %v1844
    %v1980 = vunpack.c.l.b16 %v1845
    %v1981 = vunpack.c.l.b16 %v1846
    %v1982 = vunpack.c.l.b16 %v1847
    %v1983 = vunpack.c.l.b16 %v1848
    %v1984 = vunpack.c.l.b16 %v1849
    %v1985 = vunpack.c.l.b16 %v1850
    %v1986 = vunpack.c.l.b16 %v1851
    %v1987 = vunpack.c.l.b16 %v1852
    %v1988 = vpack.c.b16 %v1925, %v1924
    %v1989 = vpack.c.b16 %v1927, %v1926
    %v1990 = vpack.c.b16 %v1929, %v1928
    %v1991 = vpack.c.b16 %v1931, %v1930
    %v1992 = vpack.c.b16 %v1933, %v1932
    %v1993 = vpack.c.b16 %v1935, %v1934
    %v1994 = vpack.c.b16 %v1937, %v1936
    %v1995 = vpack.c.b16 %v1939, %v1938
    %v1996 = vpack.c.b16 %v1941, %v1940
    %v1997 = vpack.c.b16 %v1943, %v1942
    %v1998 = vpack.c.b16 %v1945, %v1944
    %v1999 = vpack.c.b16 %v1947, %v1946
    %v2000 = vpack.c.b16 %v1949, %v1948
    %v2001 = vpack.c.b16 %v1951, %v1950
    %v2002 = vpack.c.b16 %v1953, %v1952
    %v2003 = vpack.c.b16 %v1955, %v1954
    %v2004 = vpack.c.b16 %v1957, %v1956
    %v2005 = vpack.c.b16 %v1959, %v1958
    %v2006 = vpack.c.b16 %v1961, %v1960
    %v2007 = vpack.c.b16 %v1963, %v1962
    %v2008 = vpack.c.b16 %v1965, %v1964
    %v2009 = vpack.c.b16 %v1967, %v1966
    %v2010 = vpack.c.b16 %v1969, %v1968
    %v2011 = vpack.c.b16 %v1971, %v1970
    %v2012 = vpack.c.b16 %v1973, %v1972
    %v2013 = vpack.c.b16 %v1975, %v1974
    %v2014 = vpack.c.b16 %v1977, %v1976
    %v2015 = vpack.c.b16 %v1979, %v1978
    %v2016 = vpack.c.b16 %v1981, %v1980
    %v2017 = vpack.c.b16 %v1983, %v1982
    %v2018 = vpack.c.b16 %v1985, %v1984
    %v2019 = vpack.c.b16 %v1987, %v1986
    %2052 = vmatprep.subr.bf16.mxu0 0
    %2053 = vmatpush1.bf16.msra.mxu0 %v1988
    %2054 = vmatprep.subr.bf16.mxu0 0
    %2055 = vmatpush1.bf16.msra.mxu0 %v1989
    %2056 = vmatprep.subr.bf16.mxu0 0
    %2057 = vmatpush1.bf16.msra.mxu0 %v1990
    %2058 = vmatprep.subr.bf16.mxu0 0
    %2059 = vmatpush1.bf16.msra.mxu0 %v1991
    %2060 = vmatprep.subr.bf16.mxu0 0
    %2061 = vmatpush1.bf16.msra.mxu0 %v1992
    %2062 = vmatprep.subr.bf16.mxu0 0
    %2063 = vmatpush1.bf16.msra.mxu0 %v1993
    %2064 = vmatprep.subr.bf16.mxu0 0
    %2065 = vmatpush1.bf16.msra.mxu0 %v1994
    %2066 = vmatprep.subr.bf16.mxu0 0
    %2067 = vmatpush1.bf16.msra.mxu0 %v1995
    %2068 = vmatprep.subr.bf16.mxu0 0
    %2069 = vmatpush1.bf16.msra.mxu0 %v1996
    %2070 = vmatprep.subr.bf16.mxu0 0
    %2071 = vmatpush1.bf16.msra.mxu0 %v1997
    %2072 = vmatprep.subr.bf16.mxu0 0
    %2073 = vmatpush1.bf16.msra.mxu0 %v1998
    %2074 = vmatprep.subr.bf16.mxu0 0
    %2075 = vmatpush1.bf16.msra.mxu0 %v1999
    %2076 = vmatprep.subr.bf16.mxu0 0
    %2077 = vmatpush1.bf16.msra.mxu0 %v2000
    %2078 = vmatprep.subr.bf16.mxu0 0
    %2079 = vmatpush1.bf16.msra.mxu0 %v2001
    %2080 = vmatprep.subr.bf16.mxu0 0
    %2081 = vmatpush1.bf16.msra.mxu0 %v2002
    %2082 = vmatprep.subr.bf16.mxu0 0
    %2083 = vmatpush1.bf16.msra.mxu0 %v2003
    %2084 = vmatprep.mubr.bf16.mxu0 %v1786
    %2085 = vmatmul.mubr.bf16.gmra.mrb[0].mxu0 %v1785
    %v2086 = vpop.f32.mrb[0].mxu0
    %v2087 = vadd.f32 %v1858, %v2086
    %v2088 = vpop.f32.mrb[0].mxu0
    %v2089 = vpop.f32.mrb[0].mxu0
    %v2090 = vadd.f32 %v1858, %v2089
    %v2091 = vpop.f32.mrb[0].mxu0
    %2092 = vdwg.mxu0
    %2093 = vmatprep.subr.bf16.mxu0 0
    %2094 = vmatpush1.bf16.msra.mxu0 %v2004
    %2095 = vmatprep.subr.bf16.mxu0 0
    %2096 = vmatpush1.bf16.msra.mxu0 %v2005
    %2097 = vmatprep.subr.bf16.mxu0 0
    %2098 = vmatpush1.bf16.msra.mxu0 %v2006
    %2099 = vmatprep.subr.bf16.mxu0 0
    %2100 = vmatpush1.bf16.msra.mxu0 %v2007
    %2101 = vmatprep.subr.bf16.mxu0 0
    %2102 = vmatpush1.bf16.msra.mxu0 %v2008
    %2103 = vmatprep.subr.bf16.mxu0 0
    %2104 = vmatpush1.bf16.msra.mxu0 %v2009
    %2105 = vmatprep.subr.bf16.mxu0 0
    %2106 = vmatpush1.bf16.msra.mxu0 %v2010
    %2107 = vmatprep.subr.bf16.mxu0 0
    %2108 = vmatpush1.bf16.msra.mxu0 %v2011
    %2109 = vmatprep.subr.bf16.mxu0 0
    %2110 = vmatpush1.bf16.msra.mxu0 %v2012
    %2111 = vmatprep.subr.bf16.mxu0 0
    %2112 = vmatpush1.bf16.msra.mxu0 %v2013
    %2113 = vmatprep.subr.bf16.mxu0 0
    %2114 = vmatpush1.bf16.msra.mxu0 %v2014
    %2115 = vmatprep.subr.bf16.mxu0 0
    %2116 = vmatpush1.bf16.msra.mxu0 %v2015
    %2117 = vmatprep.subr.bf16.mxu0 0
    %2118 = vmatpush1.bf16.msra.mxu0 %v2016
    %2119 = vmatprep.subr.bf16.mxu0 0
    %2120 = vmatpush1.bf16.msra.mxu0 %v2017
    %2121 = vmatprep.subr.bf16.mxu0 0
    %2122 = vmatpush1.bf16.msra.mxu0 %v2018
    %2123 = vmatprep.subr.bf16.mxu0 0
    %2124 = vmatpush1.bf16.msra.mxu0 %v2019
    %2125 = vmatprep.mubr.bf16.mxu0 %v1788
    %2126 = vmatmul.mubr.bf16.gmra.mrb[0].mxu0 %v1787
    %v2127 = vpop.f32.mrb[0].mxu0
    %v2128 = vadd.f32 %v2087, %v2127
    %v2129 = vpop.f32.mrb[0].mxu0
    %v2130 = vpop.f32.mrb[0].mxu0
    %v2131 = vadd.f32 %v2090, %v2130
    %v2132 = vpop.f32.mrb[0].mxu0
    %2133 = vdwg.mxu0
    %2134 = vst [vmem:[#allocation7] sm:$0xff] %v2128
    %2135 = vst [vmem:[#allocation7 + $0x8] sm:$0xff] %v2131
    // Predicated region
    $region38: #{tpu_custom_call.1} parent=1 // pred_check
      _
    $region39: #{tpu_custom_call.1} parent=1 // pred_check_branch
      %2137 = sbr.rel (0) target = $region41
    $region40: #{tpu_custom_call.1} parent=1 // pred_region
      %s2139 = ssub.s32 256, 256
      %2140 = vsyncadd [#allocation4], %s2139
      %s2141 = sshll.u32 [#allocation7], 4
      %s2142 = int_to_ptr.vmem [resolvable:$true] %s2141
      %2147 = dma.vmem_to_hbm [thread:$0]  %s2142, 256, %s7, [#allocation4], 128, 128, 8
    $region41: #{tpu_custom_call.1} parent=1 // pred_fallthru
      _
    // Predicated region
    $region42: #{tpu_custom_call.1} parent=1 // pred_check
      _
    $region43: #{tpu_custom_call.1} parent=1 // pred_check_branch
      %2149 = sbr.rel (0) target = $region45
    $region44: #{tpu_custom_call.1} parent=1 // pred_region
      %2150 = dma.done [#allocation4], 256
    $region45: #{tpu_custom_call.1} parent=1 // pred_fallthru
      _
    %2151 = vsyncpa [#allocation3], 1
    %2152 = vsyncpa [#allocation6], 1
    %2153 = vsyncpa [#allocation4], 1

</llo_original>
